<compile_context>
chip_gen: v5e
topology: v5e:2x2
jax: 0.10.0
libtpu: 0.0.40
codegen_flags: <defaults>
</compile_context>

<pallas_src>
import math
import functools

import jax
import jax.numpy as jnp
from jax.experimental import pallas as pl
from jax.experimental.pallas import tpu as pltpu


_MASK_BIAS = -1e30  # large finite negative (replaces -inf masked_fill; no NaN for fully-masked rows)


def _pick_vmem_limit():
    """Generation-aware scoped-VMEM limit."""
    try:
        cap = int(getattr(pltpu.get_tpu_info(), "vmem_capacity_bytes", 0))
    except Exception:
        cap = 0
    if cap <= 0:
        return 32 << 20          # unknown chip: keep the known-safe default
    if cap <= (64 << 20):
        return 32 << 20          # v7x-class: leave headroom within 64 MiB physical VMEM
    return 96 << 20              # v5e/v6e-class (128 MiB physical VMEM)


_VMEM_LIMIT = _pick_vmem_limit()


def _cparams(semantics):
    return pltpu.CompilerParams(
        dimension_semantics=tuple(semantics),
        vmem_limit_bytes=_VMEM_LIMIT,
    )


def _m_tiling(m, cap=256):
    # Fixed (<=256)-row tiles; pad the token dim instead of letting a gcd collapse to tile=8.
    if m <= cap:
        tm = -(-m // 8) * 8
        return tm, tm
    return cap, -(-m // cap) * cap


def _seq_tile(s, cap=256):
    if s <= cap:
        assert s % 8 == 0, "seq length must be a multiple of 8"  # TODO(synk): ragged seq tiles
        return s
    for t in (256, 128):
        if s % t == 0:
            return t
    return s  # TODO(synk): pad ragged sequence lengths to a 128 multiple


def _ffn_tile(f, cap=512):
    if f <= cap:
        return f
    for t in (512, 384, 256, 128):
        if f % t == 0:
            return t
    return f  # TODO(synk): pad the 4H dim when it is not 128-divisible


# --------------------------------- kernels --------------------------------- #

def _proj_kernel(x_ref, w_ref, b_ref, q_ref, k_ref, v_ref, r_ref, *, num_heads, head_dim):
    """x @ [Wq/s | Wk | Wv | Wq@Wr] in one MXU pass; scatter per-head columns into
    head-major (nh, tm, d) output blocks (split_heads happens once, in VMEM)."""
    H = num_heads * head_dim
    xb = x_ref[...].astype(jnp.bfloat16)
    res = jnp.dot(xb, w_ref[...], preferred_element_type=jnp.float32) + b_ref[...]
    for h in range(num_heads):
        lo = h * head_dim
        hi = lo + head_dim
        q_ref[h, :, :] = res[:, lo:hi].astype(q_ref.dtype)
        k_ref[h, :, :] = res[:, H + lo:H + hi].astype(k_ref.dtype)
        v_ref[h, :, :] = res[:, 2 * H + lo:2 * H + hi].astype(v_ref.dtype)
        r_ref[h, :, :] = res[:, 3 * H + lo:3 * H + hi].astype(r_ref.dtype)


def _flash_attn_kernel(q_ref, k_ref, v_ref, r_ref, bias_ref, o_ref, m_ref, l_ref, acc_ref):
    """One (batch, head, q-tile, kv-tile) step of online-softmax attention with r-gating."""
    ki = pl.program_id(3)

    @pl.when(ki == 0)
    def _():
        m_ref[...] = jnp.full(m_ref.shape, _MASK_BIAS, m_ref.dtype)
        l_ref[...] = jnp.zeros(l_ref.shape, l_ref.dtype)
        acc_ref[...] = jnp.zeros(acc_ref.shape, acc_ref.dtype)

    q = q_ref[0]                      # (tq, d) bf16, 1/sqrt(d) already folded into the weights
    k = k_ref[0]                      # (tk, d)
    s = jax.lax.dot_general(q, k, (((1,), (1,)), ((), ())),
                            preferred_element_type=jnp.float32)        # (tq, tk) f32
    s = s + bias_ref[...]             # additive mask bias (0 / -1e30), hoisted out of heads

    m_prev = m_ref[...]
    m_new = jnp.maximum(m_prev, jnp.max(s, axis=-1, keepdims=True))
    alpha = jnp.exp(m_prev - m_new)
    p = jnp.exp(s - m_new)
    l_ref[...] = alpha * l_ref[...] + jnp.sum(p, axis=-1, keepdims=True)
    acc_ref[...] = alpha * acc_ref[...] + jnp.dot(
        p.astype(v_ref.dtype), v_ref[0], preferred_element_type=jnp.float32)
    m_ref[...] = m_new

    # TODO(synk): skip fully-masked (causal) KV tiles via a scalar-prefetched block map.
    @pl.when(ki == pl.num_programs(3) - 1)
    def _():
        inv_l = pl.reciprocal(l_ref[...], approx=True)
        gated = acc_ref[...] * inv_l * r_ref[0].astype(jnp.float32)    # multiplicative gate
        o_ref[0, :, :] = gated.astype(o_ref.dtype)


def _oproj_add_ln_kernel(ctx_ref, res_ref, wo_ref, bo_ref, g_ref, b_ref, o_ref, *, num_heads):
    """Head-major o_proj (sum_h ctx_h @ Wo_h) + residual add + LayerNorm (one-pass stats)."""
    acc = jnp.dot(ctx_ref[0], wo_ref[0], preferred_element_type=jnp.float32)
    for h in range(1, num_heads):
        acc = acc + jnp.dot(ctx_ref[h], wo_ref[h], preferred_element_type=jnp.float32)
    z = acc + bo_ref[...] + res_ref[...]
    n = z.shape[-1]
    mu = jnp.sum(z, axis=-1, keepdims=True) * (1.0 / n)
    var = jnp.maximum(jnp.sum(z * z, axis=-1, keepdims=True) * (1.0 / n) - mu * mu, 0.0)
    o_ref[...] = ((z - mu) * jax.lax.rsqrt(var + 1e-5) * g_ref[...] + b_ref[...]).astype(o_ref.dtype)


def _ffn_add_ln_kernel(x_ref, w1_ref, b1_ref, w2_ref, b2_ref, g_ref, bln_ref, o_ref, acc_ref):
    """FFN blocked over the 4H dim with an f32 accumulator, then residual + LayerNorm."""
    j = pl.program_id(1)

    @pl.when(j == 0)
    def _():
        acc_ref[...] = jnp.zeros(acc_ref.shape, acc_ref.dtype)

    xb = x_ref[...].astype(jnp.bfloat16)
    h = jnp.dot(xb, w1_ref[...], preferred_element_type=jnp.float32) + b1_ref[...]
    h = jnp.maximum(h, 0.0).astype(jnp.bfloat16)                        # relu (dropout = identity)
    acc_ref[...] += jnp.dot(h, w2_ref[...], preferred_element_type=jnp.float32)

    @pl.when(j == pl.num_programs(1) - 1)
    def _():
        z = acc_ref[...] + b2_ref[...] + x_ref[...]                     # residual kept in f32
        n = z.shape[-1]
        mu = jnp.sum(z, axis=-1, keepdims=True) * (1.0 / n)
        var = jnp.maximum(jnp.sum(z * z, axis=-1, keepdims=True) * (1.0 / n) - mu * mu, 0.0)
        o_ref[...] = ((z - mu) * jax.lax.rsqrt(var + 1e-5) * g_ref[...] + bln_ref[...]).astype(
            o_ref.dtype)


# ----------------------------- kernel wrappers ------------------------------ #

def qkvr_proj(x, w_proj, b_proj, num_heads, head_dim, tm):
    m_pad, H = x.shape
    kern = functools.partial(_proj_kernel, num_heads=num_heads, head_dim=head_dim)
    head_out = jax.ShapeDtypeStruct((num_heads, m_pad, head_dim), jnp.bfloat16)
    head_spec = pl.BlockSpec((num_heads, tm, head_dim), lambda i: (0, i, 0))
    return pl.pallas_call(
        kern,
        grid=(m_pad // tm,),
        in_specs=[
            pl.BlockSpec((tm, H), lambda i: (i, 0)),
            # TODO(synk): constant-index weights are still double-buffered by the pipeline;
            # for very large H, stage them once into VMEM scratch or block the 4H output dim.
            pl.BlockSpec((H, 4 * H), lambda i: (0, 0)),
            pl.BlockSpec((1, 4 * H), lambda i: (0, 0)),
        ],
        out_specs=(head_spec, head_spec, head_spec, head_spec),
        out_shape=(head_out, head_out, head_out, head_out),
        compiler_params=_cparams(("parallel",)),
    )(x, w_proj, b_proj.reshape(1, -1))


def flash_gated_attention(q, k, v, r, bias, batch, seq):
    nh, m_pad, d = q.shape
    tq = _seq_tile(seq)
    tk = _seq_tile(seq)
    nq, nk = seq // tq, seq // tk
    qr_spec = pl.BlockSpec((1, tq, d), lambda b, h, qi, ki: (h, b * nq + qi, 0))
    kv_spec = pl.BlockSpec((1, tk, d), lambda b, h, qi, ki: (h, b * nk + ki, 0))
    bias_spec = pl.BlockSpec((tq, tk), lambda b, h, qi, ki: (qi, ki))
    out_spec = pl.BlockSpec((1, tq, d), lambda b, h, qi, ki: (h, b * nq + qi, 0))
    # TODO(synk): pad heads so head_dim >= 128 on production shapes (lane-dense blocks, full MXU).
    return pl.pallas_call(
        _flash_attn_kernel,
        grid=(batch, nh, nq, nk),
        in_specs=[qr_spec, kv_spec, kv_spec, qr_spec, bias_spec],
        out_specs=out_spec,
        out_shape=jax.ShapeDtypeStruct((nh, m_pad, d), jnp.bfloat16),
        scratch_shapes=[
            pltpu.VMEM((tq, 1), jnp.float32),   # running max m
            pltpu.VMEM((tq, 1), jnp.float32),   # running denom l
            pltpu.VMEM((tq, d), jnp.float32),   # running accumulator
        ],
        compiler_params=_cparams(("parallel", "parallel", "parallel", "arbitrary")),
    )(q, k, v, r, bias)


def oproj_add_ln(ctx, residual, wo3, bo, gamma, beta, tm):
    nh, m_pad, d = ctx.shape
    H = nh * d
    kern = functools.partial(_oproj_add_ln_kernel, num_heads=nh)
    return pl.pallas_call(
        kern,
        grid=(m_pad // tm,),
        in_specs=[
            pl.BlockSpec((nh, tm, d), lambda i: (0, i, 0)),
            pl.BlockSpec((tm, H), lambda i: (i, 0)),
            pl.BlockSpec((nh, d, H), lambda i: (0, 0, 0)),
            pl.BlockSpec((1, H), lambda i: (0, 0)),
            pl.BlockSpec((1, H), lambda i: (0, 0)),
            pl.BlockSpec((1, H), lambda i: (0, 0)),
        ],
        out_specs=pl.BlockSpec((tm, H), lambda i: (i, 0)),
        out_shape=jax.ShapeDtypeStruct((m_pad, H), jnp.float32),
        compiler_params=_cparams(("parallel",)),
    )(ctx, residual, wo3, bo.reshape(1, H), gamma.reshape(1, H), beta.reshape(1, H))


def ffn_add_ln(x, w1, b1, w2, b2, gamma, beta, tm):
    m_pad, H = x.shape
    F = w1.shape[1]
    tf = _ffn_tile(F)
    return pl.pallas_call(
        _ffn_add_ln_kernel,
        grid=(m_pad // tm, F // tf),
        in_specs=[
            pl.BlockSpec((tm, H), lambda i, j: (i, 0)),
            pl.BlockSpec((H, tf), lambda i, j: (0, j)),
            pl.BlockSpec((1, tf), lambda i, j: (0, j)),
            pl.BlockSpec((tf, H), lambda i, j: (j, 0)),
            pl.BlockSpec((1, H), lambda i, j: (0, 0)),
            pl.BlockSpec((1, H), lambda i, j: (0, 0)),
            pl.BlockSpec((1, H), lambda i, j: (0, 0)),
        ],
        out_specs=pl.BlockSpec((tm, H), lambda i, j: (i, 0)),
        out_shape=jax.ShapeDtypeStruct((m_pad, H), jnp.float32),
        scratch_shapes=[pltpu.VMEM((tm, H), jnp.float32)],
        compiler_params=_cparams(("parallel", "arbitrary")),
    )(x, w1, b1.reshape(1, F), w2, b2.reshape(1, H), gamma.reshape(1, H), beta.reshape(1, H))


# ----------------------------- parameters ----------------------------------- #

def init_raw_params(key, hidden_size):
    """f32 parameters matching the PyTorch module (Linear weights stored as (in, out))."""
    H = hidden_size
    ks = jax.random.split(key, 14)

    def lin(kw, kb, fan_in, fan_out):
        bound = 1.0 / math.sqrt(fan_in)
        w = jax.random.uniform(kw, (fan_in, fan_out), jnp.float32, -bound, bound)
        b = jax.random.uniform(kb, (fan_out,), jnp.float32, -bound, bound)
        return w, b

    wq, bq = lin(ks[0], ks[1], H, H)
    wk, bk = lin(ks[2], ks[3], H, H)
    wv, bv = lin(ks[4], ks[5], H, H)
    wr, br = lin(ks[6], ks[7], H, H)
    wo, bo = lin(ks[8], ks[9], H, H)
    w1, b1 = lin(ks[10], ks[11], H, 4 * H)
    w2, b2 = lin(ks[12], ks[13], 4 * H, H)
    return dict(wq=wq, bq=bq, wk=wk, bk=bk, wv=wv, bv=bv, wr=wr, br=br, wo=wo, bo=bo,
                w1=w1, b1=b1, w2=w2, b2=b2,
                ln1_g=jnp.ones((H,), jnp.float32), ln1_b=jnp.zeros((H,), jnp.float32),
                ln2_g=jnp.ones((H,), jnp.float32), ln2_b=jnp.zeros((H,), jnp.float32))


def prepare_params(raw, num_heads):
    """Param-prep-time algebraic folds:
       * r = r_proj(q_proj(x))  ->  Wqr = Wq @ Wr, bqr = bq @ Wr + br (no serial q->r matmul)
       * 1/sqrt(head_dim) folded into the q columns / bias
       * Wo reshaped head-major (nh, d, H) for the head-major o_proj contraction.
       Weights stored bf16; biases / LayerNorm params kept f32."""
    H = raw["wq"].shape[0]
    d = H // num_heads
    inv_scale = 1.0 / math.sqrt(d)
    w_qr = raw["wq"] @ raw["wr"]
    b_qr = raw["bq"] @ raw["wr"] + raw["br"]
    w_proj = jnp.concatenate(
        [raw["wq"] * inv_scale, raw["wk"], raw["wv"], w_qr], axis=1).astype(jnp.bfloat16)
    b_proj = jnp.concatenate(
        [raw["bq"] * inv_scale, raw["bk"], raw["bv"], b_qr]).astype(jnp.float32)
    return dict(
        w_proj=w_proj, b_proj=b_proj,
        wo3=raw["wo"].reshape(num_heads, d, H).astype(jnp.bfloat16), bo=raw["bo"],
        ln1_g=raw["ln1_g"], ln1_b=raw["ln1_b"],
        w1=raw["w1"].astype(jnp.bfloat16), b1=raw["b1"],
        w2=raw["w2"].astype(jnp.bfloat16), b2=raw["b2"],
        ln2_g=raw["ln2_g"], ln2_b=raw["ln2_b"],
    )


# ------------------------------- forward pass ------------------------------- #

def tp_decoder_layer_forward(params, x, attn_mask, *, num_heads):
    """x: (B, S, H) f32, attn_mask: (S, S) int (0 = masked). Returns (B, S, H) f32."""
    B, S, H = x.shape
    d = H // num_heads
    M = B * S
    tm, m_pad = _m_tiling(M)

    x2 = x.reshape(M, H).astype(jnp.float32)
    if m_pad != M:
        x2 = jnp.pad(x2, ((0, m_pad - M), (0, 0)))

    # Additive mask bias, computed once (no per-head compares, no -inf NaN hazard).
    bias = jnp.where(attn_mask != 0, 0.0, _MASK_BIAS).astype(jnp.float32)

    # Fused q/k/v/(r = r_proj(q_proj(x))) projection -> head-major (nh, M, d) slabs.
    q, k, v, r = qkvr_proj(x2, params["w_proj"], params["b_proj"], num_heads, d, tm)

    # Flash-style gated attention, grid (B, heads, q-tiles, kv-tiles).
    ctx = flash_gated_attention(q, k, v, r, bias, B, S)

    # o_proj + residual + LayerNorm1 (dropout = identity).
    x1 = oproj_add_ln(ctx, x2, params["wo3"], params["bo"], params["ln1_g"], params["ln1_b"], tm)

    # FFN (4H-blocked) + residual + LayerNorm2 (dropout = identity).
    out = ffn_add_ln(x1, params["w1"], params["b1"], params["w2"], params["b2"],
                     params["ln2_g"], params["ln2_b"], tm)
    return out[:M].reshape(B, S, H)


# ---------------------------------- main ------------------------------------ #

if __name__ == "__main__":
    HIDDEN = 32
    NUM_HEADS = 4   # head_dim = 8 at this toy size; use head_dim >= 128 for production shapes
    BATCH = 2
    SEQ = 8

    key = jax.random.PRNGKey(0)
    pkey, xkey = jax.random.split(key)
    params = prepare_params(init_raw_params(pkey, HIDDEN), NUM_HEADS)
    x = jax.random.normal(xkey, (BATCH, SEQ, HIDDEN), jnp.float32)
    attn_mask = jnp.tril(jnp.ones((SEQ, SEQ), jnp.int32))   # causal mask (1 = keep, 0 = masked)

    fwd = jax.jit(functools.partial(tp_decoder_layer_forward, num_heads=NUM_HEADS))
    out = fwd(params, x, attn_mask)
    jax.block_until_ready(out)

    assert out.shape == (BATCH, SEQ, HIDDEN)
    assert bool(jnp.all(jnp.isfinite(out)))
    print("KERNEL_OK")
</pallas_src>

<mosaic_0001>
module attributes {stable_mosaic.version = 11 : i64} {
  func.func @_flash_attn_kernel(%arg0: i32, %arg1: i32, %arg2: i32, %arg3: i32, %arg4: memref<1x8x8xbf16, #tpu.memory_space<vmem>>, %arg5: memref<1x8x8xbf16, #tpu.memory_space<vmem>>, %arg6: memref<1x8x8xbf16, #tpu.memory_space<vmem>>, %arg7: memref<1x8x8xbf16, #tpu.memory_space<vmem>>, %arg8: memref<8x8xf32, #tpu.memory_space<vmem>>, %arg9: memref<1x8x8xbf16, #tpu.memory_space<vmem>>, %arg10: memref<8x1xf32, #tpu.memory_space<vmem>>, %arg11: memref<8x1xf32, #tpu.memory_space<vmem>>, %arg12: memref<8x8xf32, #tpu.memory_space<vmem>>) attributes {dimension_semantics = [#tpu.dimension_semantics<parallel>, #tpu.dimension_semantics<parallel>, #tpu.dimension_semantics<parallel>, #tpu.dimension_semantics<arbitrary>], iteration_bounds = array<i64: 2, 4, 1, 1>, scalar_prefetch = 0 : i64, scratch_operands = 3 : i64, tpu.core_type = #tpu.core_type<tc>, window_params = [{transform_indices = @transform_0, window_bounds = array<i64: 1, 8, 8>}, {transform_indices = @transform_1, window_bounds = array<i64: 1, 8, 8>}, {transform_indices = @transform_2, window_bounds = array<i64: 1, 8, 8>}, {transform_indices = @transform_3, window_bounds = array<i64: 1, 8, 8>}, {transform_indices = @transform_4, window_bounds = array<i64: 8, 8>}, {transform_indices = @transform_5, window_bounds = array<i64: 1, 8, 8>}]} {
    %c0_i32 = arith.constant 0 : i32
    %0 = arith.cmpi eq, %arg3, %c0_i32 : i32
    %1 = arith.extui %0 : i1 to i32
    %c0_i32_0 = arith.constant 0 : i32
    %2 = arith.cmpi ne, %1, %c0_i32_0 : i32
    scf.if %2 {
      %cst_28 = arith.constant -1.000000e+30 : f32
      %38 = vector.broadcast %cst_28 : f32 to vector<8x1xf32>
      %c0_29 = arith.constant 0 : index
      %c0_30 = arith.constant 0 : index
      %39 = vector.load %arg10[%c0_29, %c0_30] : memref<8x1xf32, #tpu.memory_space<vmem>>, vector<8x1xf32>
      tpu.vector_store %arg10[%c0_29, %c0_30], %38 {strides = array<i32>} : memref<8x1xf32, #tpu.memory_space<vmem>>, vector<8x1xf32>,
      %cst_31 = arith.constant 0.000000e+00 : f32
      %40 = vector.broadcast %cst_31 : f32 to vector<8x1xf32>
      %c0_32 = arith.constant 0 : index
      %c0_33 = arith.constant 0 : index
      %41 = vector.load %arg11[%c0_32, %c0_33] : memref<8x1xf32, #tpu.memory_space<vmem>>, vector<8x1xf32>
      tpu.vector_store %arg11[%c0_32, %c0_33], %40 {strides = array<i32>} : memref<8x1xf32, #tpu.memory_space<vmem>>, vector<8x1xf32>,
      %cst_34 = arith.constant 0.000000e+00 : f32
      %42 = vector.broadcast %cst_34 : f32 to vector<8x8xf32>
      %c0_35 = arith.constant 0 : index
      %c0_36 = arith.constant 0 : index
      %43 = vector.load %arg12[%c0_35, %c0_36] : memref<8x8xf32, #tpu.memory_space<vmem>>, vector<8x8xf32>
      tpu.vector_store %arg12[%c0_35, %c0_36], %42 {strides = array<i32>} : memref<8x8xf32, #tpu.memory_space<vmem>>, vector<8x8xf32>,
    } else {
    }
    %c0 = arith.constant 0 : index
    %c0_1 = arith.constant 0 : index
    %c0_2 = arith.constant 0 : index
    %3 = vector.load %arg4[%c0, %c0_1, %c0_2] : memref<1x8x8xbf16, #tpu.memory_space<vmem>>, vector<1x8x8xbf16>
    %4 = vector.shape_cast %3 : vector<1x8x8xbf16> to vector<8x8xbf16>
    %c0_3 = arith.constant 0 : index
    %c0_4 = arith.constant 0 : index
    %c0_5 = arith.constant 0 : index
    %5 = vector.load %arg5[%c0_3, %c0_4, %c0_5] : memref<1x8x8xbf16, #tpu.memory_space<vmem>>, vector<1x8x8xbf16>
    %6 = vector.shape_cast %5 : vector<1x8x8xbf16> to vector<8x8xbf16>
    %cst = arith.constant dense<0.000000e+00> : vector<8x8xf32>
    %7 = tpu.matmul %4, %6, %cst {dimension_numbers = #tpu.dot_dimension_numbers<[1], [1], [0], [0], [0, 0, 1, 0], [], []>} : vector<8x8xbf16>, vector<8x8xbf16>, vector<8x8xf32> -> vector<8x8xf32>
    %c0_6 = arith.constant 0 : index
    %c0_7 = arith.constant 0 : index
    %8 = vector.load %arg8[%c0_6, %c0_7] : memref<8x8xf32, #tpu.memory_space<vmem>>, vector<8x8xf32>
    %9 = arith.addf %7, %8 : vector<8x8xf32>
    %c0_8 = arith.constant 0 : index
    %c0_9 = arith.constant 0 : index
    %10 = vector.load %arg10[%c0_8, %c0_9] : memref<8x1xf32, #tpu.memory_space<vmem>>, vector<8x1xf32>
    %cst_10 = arith.constant dense<0xFF800000> : vector<8xf32>
    %11 = vector.multi_reduction <maximumf>, %9, %cst_10 [1] : vector<8x8xf32> to vector<8xf32>
    %12 = vector.shape_cast %11 : vector<8xf32> to vector<8x1xf32>
    %13 = arith.maximumf %10, %12 : vector<8x1xf32>
    %14 = arith.subf %10, %13 : vector<8x1xf32>
    %15 = math.exp %14 : vector<8x1xf32>
    %16 = vector.broadcast %13 : vector<8x1xf32> to vector<8x8xf32>
    %17 = arith.subf %9, %16 : vector<8x8xf32>
    %18 = math.exp %17 : vector<8x8xf32>
    %c0_11 = arith.constant 0 : index
    %c0_12 = arith.constant 0 : index
    %19 = vector.load %arg11[%c0_11, %c0_12] : memref<8x1xf32, #tpu.memory_space<vmem>>, vector<8x1xf32>
    %20 = arith.mulf %15, %19 : vector<8x1xf32>
    %cst_13 = arith.constant dense<0.000000e+00> : vector<8xf32>
    %21 = vector.multi_reduction <add>, %18, %cst_13 [1] : vector<8x8xf32> to vector<8xf32>
    %22 = vector.shape_cast %21 : vector<8xf32> to vector<8x1xf32>
    %23 = arith.addf %20, %22 : vector<8x1xf32>
    %c0_14 = arith.constant 0 : index
    %c0_15 = arith.constant 0 : index
    %24 = vector.load %arg11[%c0_14, %c0_15] : memref<8x1xf32, #tpu.memory_space<vmem>>, vector<8x1xf32>
    tpu.vector_store %arg11[%c0_14, %c0_15], %23 {strides = array<i32>} : memref<8x1xf32, #tpu.memory_space<vmem>>, vector<8x1xf32>,
    %c0_16 = arith.constant 0 : index
    %c0_17 = arith.constant 0 : index
    %25 = vector.load %arg12[%c0_16, %c0_17] : memref<8x8xf32, #tpu.memory_space<vmem>>, vector<8x8xf32>
    %26 = vector.broadcast %15 : vector<8x1xf32> to vector<8x8xf32>
    %27 = arith.mulf %26, %25 : vector<8x8xf32>
    %28 = arith.truncf %18 : vector<8x8xf32> to vector<8x8xbf16>
    %c0_18 = arith.constant 0 : index
    %c0_19 = arith.constant 0 : index
    %c0_20 = arith.constant 0 : index
    %29 = vector.load %arg6[%c0_18, %c0_19, %c0_20] : memref<1x8x8xbf16, #tpu.memory_space<vmem>>, vector<1x8x8xbf16>
    %30 = vector.shape_cast %29 : vector<1x8x8xbf16> to vector<8x8xbf16>
    %cst_21 = arith.constant dense<0.000000e+00> : vector<8x8xf32>
    %31 = tpu.matmul %28, %30, %cst_21 {dimension_numbers = #tpu.dot_dimension_numbers<[1], [0], [0], [1], [0, 0, 1, 1], [], []>} : vector<8x8xbf16>, vector<8x8xbf16>, vector<8x8xf32> -> vector<8x8xf32>
    %32 = arith.addf %27, %31 : vector<8x8xf32>
    %c0_22 = arith.constant 0 : index
    %c0_23 = arith.constant 0 : index
    %33 = vector.load %arg12[%c0_22, %c0_23] : memref<8x8xf32, #tpu.memory_space<vmem>>, vector<8x8xf32>
    tpu.vector_store %arg12[%c0_22, %c0_23], %32 {strides = array<i32>} : memref<8x8xf32, #tpu.memory_space<vmem>>, vector<8x8xf32>,
    %c0_24 = arith.constant 0 : index
    %c0_25 = arith.constant 0 : index
    %34 = vector.load %arg10[%c0_24, %c0_25] : memref<8x1xf32, #tpu.memory_space<vmem>>, vector<8x1xf32>
    tpu.vector_store %arg10[%c0_24, %c0_25], %13 {strides = array<i32>} : memref<8x1xf32, #tpu.memory_space<vmem>>, vector<8x1xf32>,
    %c0_i32_26 = arith.constant 0 : i32
    %35 = arith.cmpi eq, %arg3, %c0_i32_26 : i32
    %36 = arith.extui %35 : i1 to i32
    %c0_i32_27 = arith.constant 0 : i32
    %37 = arith.cmpi ne, %36, %c0_i32_27 : i32
    scf.if %37 {
      %c0_28 = arith.constant 0 : index
      %c0_29 = arith.constant 0 : index
      %38 = vector.load %arg11[%c0_28, %c0_29] : memref<8x1xf32, #tpu.memory_space<vmem>>, vector<8x1xf32>
      %39 = tpu.reciprocal %38 {approx = true} : vector<8x1xf32> -> vector<8x1xf32>
      %c0_30 = arith.constant 0 : index
      %c0_31 = arith.constant 0 : index
      %40 = vector.load %arg12[%c0_30, %c0_31] : memref<8x8xf32, #tpu.memory_space<vmem>>, vector<8x8xf32>
      %41 = vector.broadcast %39 : vector<8x1xf32> to vector<8x8xf32>
      %42 = arith.mulf %40, %41 : vector<8x8xf32>
      %c0_32 = arith.constant 0 : index
      %c0_33 = arith.constant 0 : index
      %c0_34 = arith.constant 0 : index
      %43 = vector.load %arg7[%c0_32, %c0_33, %c0_34] : memref<1x8x8xbf16, #tpu.memory_space<vmem>>, vector<1x8x8xbf16>
      %44 = vector.shape_cast %43 : vector<1x8x8xbf16> to vector<8x8xbf16>
      %45 = arith.extf %44 : vector<8x8xbf16> to vector<8x8xf32>
      %46 = arith.mulf %42, %45 : vector<8x8xf32>
      %47 = arith.truncf %46 : vector<8x8xf32> to vector<8x8xbf16>
      %c0_35 = arith.constant 0 : index
      %c0_36 = arith.constant 0 : index
      %c0_37 = arith.constant 0 : index
      %48 = vector.load %arg9[%c0_35, %c0_36, %c0_37] : memref<1x8x8xbf16, #tpu.memory_space<vmem>>, vector<1x8x8xbf16>
      %49 = vector.shape_cast %48 : vector<1x8x8xbf16> to vector<8x8xbf16>
      %50 = vector.shape_cast %47 : vector<8x8xbf16> to vector<1x8x8xbf16>
      tpu.vector_store %arg9[%c0_35, %c0_36, %c0_37], %50 {strides = array<i32>} : memref<1x8x8xbf16, #tpu.memory_space<vmem>>, vector<1x8x8xbf16>,
    } else {
    }
    return
  }
  func.func @transform_0(%arg0: i32, %arg1: i32, %arg2: i32, %arg3: i32) -> (i32, i32, i32) {
    %c1_i32 = arith.constant 1 : i32
    %0 = arith.muli %arg0, %c1_i32 : i32
    %1 = arith.addi %0, %arg2 : i32
    %c0_i32 = arith.constant 0 : i32
    %c0_i32_0 = arith.constant 0 : i32
    return %arg1, %1, %c0_i32 : i32, i32, i32
  }
  func.func @transform_1(%arg0: i32, %arg1: i32, %arg2: i32, %arg3: i32) -> (i32, i32, i32) {
    %c1_i32 = arith.constant 1 : i32
    %0 = arith.muli %arg0, %c1_i32 : i32
    %1 = arith.addi %0, %arg3 : i32
    %c0_i32 = arith.constant 0 : i32
    %c0_i32_0 = arith.constant 0 : i32
    return %arg1, %1, %c0_i32 : i32, i32, i32
  }
  func.func @transform_2(%arg0: i32, %arg1: i32, %arg2: i32, %arg3: i32) -> (i32, i32, i32) {
    %c1_i32 = arith.constant 1 : i32
    %0 = arith.muli %arg0, %c1_i32 : i32
    %1 = arith.addi %0, %arg3 : i32
    %c0_i32 = arith.constant 0 : i32
    %c0_i32_0 = arith.constant 0 : i32
    return %arg1, %1, %c0_i32 : i32, i32, i32
  }
  func.func @transform_3(%arg0: i32, %arg1: i32, %arg2: i32, %arg3: i32) -> (i32, i32, i32) {
    %c1_i32 = arith.constant 1 : i32
    %0 = arith.muli %arg0, %c1_i32 : i32
    %1 = arith.addi %0, %arg2 : i32
    %c0_i32 = arith.constant 0 : i32
    %c0_i32_0 = arith.constant 0 : i32
    return %arg1, %1, %c0_i32 : i32, i32, i32
  }
  func.func @transform_4(%arg0: i32, %arg1: i32, %arg2: i32, %arg3: i32) -> (i32, i32) {
    %c0_i32 = arith.constant 0 : i32
    return %arg2, %arg3 : i32, i32
  }
  func.func @transform_5(%arg0: i32, %arg1: i32, %arg2: i32, %arg3: i32) -> (i32, i32, i32) {
    %c1_i32 = arith.constant 1 : i32
    %0 = arith.muli %arg0, %c1_i32 : i32
    %1 = arith.addi %0, %arg2 : i32
    %c0_i32 = arith.constant 0 : i32
    %c0_i32_0 = arith.constant 0 : i32
    return %arg1, %1, %c0_i32 : i32, i32, i32
  }
}

module attributes {stable_mosaic.version = 11 : i64} {
  func.func @_proj_kernel(%arg0: i32, %arg1: memref<16x32xf32, #tpu.memory_space<vmem>>, %arg2: memref<32x128xbf16, #tpu.memory_space<vmem>>, %arg3: memref<1x128xf32, #tpu.memory_space<vmem>>, %arg4: memref<4x16x8xbf16, #tpu.memory_space<vmem>>, %arg5: memref<4x16x8xbf16, #tpu.memory_space<vmem>>, %arg6: memref<4x16x8xbf16, #tpu.memory_space<vmem>>, %arg7: memref<4x16x8xbf16, #tpu.memory_space<vmem>>) attributes {dimension_semantics = [#tpu.dimension_semantics<parallel>], iteration_bounds = array<i64: 1>, scalar_prefetch = 0 : i64, scratch_operands = 0 : i64, tpu.core_type = #tpu.core_type<tc>, window_params = [{transform_indices = @transform_0, window_bounds = array<i64: 16, 32>}, {pipeline_mode = #tpu.pipeline_mode<synchronous>, transform_indices = @transform_1, window_bounds = array<i64: 32, 128>}, {pipeline_mode = #tpu.pipeline_mode<synchronous>, transform_indices = @transform_2, window_bounds = array<i64: 1, 128>}, {transform_indices = @transform_3, window_bounds = array<i64: 4, 16, 8>}, {transform_indices = @transform_4, window_bounds = array<i64: 4, 16, 8>}, {transform_indices = @transform_5, window_bounds = array<i64: 4, 16, 8>}, {transform_indices = @transform_6, window_bounds = array<i64: 4, 16, 8>}]} {
    %c0 = arith.constant 0 : index
    %c0_0 = arith.constant 0 : index
    %0 = vector.load %arg1[%c0, %c0_0] : memref<16x32xf32, #tpu.memory_space<vmem>>, vector<16x32xf32>
    %1 = arith.truncf %0 : vector<16x32xf32> to vector<16x32xbf16>
    %c0_1 = arith.constant 0 : index
    %c0_2 = arith.constant 0 : index
    %2 = vector.load %arg2[%c0_1, %c0_2] : memref<32x128xbf16, #tpu.memory_space<vmem>>, vector<32x128xbf16>
    %cst = arith.constant dense<0.000000e+00> : vector<16x128xf32>
    %3 = tpu.matmul %1, %2, %cst {dimension_numbers = #tpu.dot_dimension_numbers<[1], [0], [0], [1], [0, 0, 1, 1], [], []>} : vector<16x32xbf16>, vector<32x128xbf16>, vector<16x128xf32> -> vector<16x128xf32>
    %c0_3 = arith.constant 0 : index
    %c0_4 = arith.constant 0 : index
    %4 = vector.load %arg3[%c0_3, %c0_4] : memref<1x128xf32, #tpu.memory_space<vmem>>, vector<1x128xf32>
    %5 = vector.broadcast %4 : vector<1x128xf32> to vector<16x128xf32>
    %6 = arith.addf %3, %5 : vector<16x128xf32>
    %7 = vector.extract_strided_slice %6 {offsets = [0, 0], sizes = [16, 8], strides = [1, 1]} : vector<16x128xf32> to vector<16x8xf32>
    %8 = arith.truncf %7 : vector<16x8xf32> to vector<16x8xbf16>
    %c0_5 = arith.constant 0 : index
    %c0_6 = arith.constant 0 : index
    %c0_7 = arith.constant 0 : index
    %9 = vector.load %arg4[%c0_5, %c0_6, %c0_7] : memref<4x16x8xbf16, #tpu.memory_space<vmem>>, vector<1x16x8xbf16>
    %10 = vector.shape_cast %9 : vector<1x16x8xbf16> to vector<16x8xbf16>
    %11 = vector.shape_cast %8 : vector<16x8xbf16> to vector<1x16x8xbf16>
    tpu.vector_store %arg4[%c0_5, %c0_6, %c0_7], %11 {strides = array<i32>} : memref<4x16x8xbf16, #tpu.memory_space<vmem>>, vector<1x16x8xbf16>,
    %12 = vector.extract_strided_slice %6 {offsets = [0, 32], sizes = [16, 8], strides = [1, 1]} : vector<16x128xf32> to vector<16x8xf32>
    %13 = arith.truncf %12 : vector<16x8xf32> to vector<16x8xbf16>
    %c0_8 = arith.constant 0 : index
    %c0_9 = arith.constant 0 : index
    %c0_10 = arith.constant 0 : index
    %14 = vector.load %arg5[%c0_8, %c0_9, %c0_10] : memref<4x16x8xbf16, #tpu.memory_space<vmem>>, vector<1x16x8xbf16>
    %15 = vector.shape_cast %14 : vector<1x16x8xbf16> to vector<16x8xbf16>
    %16 = vector.shape_cast %13 : vector<16x8xbf16> to vector<1x16x8xbf16>
    tpu.vector_store %arg5[%c0_8, %c0_9, %c0_10], %16 {strides = array<i32>} : memref<4x16x8xbf16, #tpu.memory_space<vmem>>, vector<1x16x8xbf16>,
    %17 = vector.extract_strided_slice %6 {offsets = [0, 64], sizes = [16, 8], strides = [1, 1]} : vector<16x128xf32> to vector<16x8xf32>
    %18 = arith.truncf %17 : vector<16x8xf32> to vector<16x8xbf16>
    %c0_11 = arith.constant 0 : index
    %c0_12 = arith.constant 0 : index
    %c0_13 = arith.constant 0 : index
    %19 = vector.load %arg6[%c0_11, %c0_12, %c0_13] : memref<4x16x8xbf16, #tpu.memory_space<vmem>>, vector<1x16x8xbf16>
    %20 = vector.shape_cast %19 : vector<1x16x8xbf16> to vector<16x8xbf16>
    %21 = vector.shape_cast %18 : vector<16x8xbf16> to vector<1x16x8xbf16>
    tpu.vector_store %arg6[%c0_11, %c0_12, %c0_13], %21 {strides = array<i32>} : memref<4x16x8xbf16, #tpu.memory_space<vmem>>, vector<1x16x8xbf16>,
    %22 = vector.extract_strided_slice %6 {offsets = [0, 96], sizes = [16, 8], strides = [1, 1]} : vector<16x128xf32> to vector<16x8xf32>
    %23 = arith.truncf %22 : vector<16x8xf32> to vector<16x8xbf16>
    %c0_14 = arith.constant 0 : index
    %c0_15 = arith.constant 0 : index
    %c0_16 = arith.constant 0 : index
    %24 = vector.load %arg7[%c0_14, %c0_15, %c0_16] : memref<4x16x8xbf16, #tpu.memory_space<vmem>>, vector<1x16x8xbf16>
    %25 = vector.shape_cast %24 : vector<1x16x8xbf16> to vector<16x8xbf16>
    %26 = vector.shape_cast %23 : vector<16x8xbf16> to vector<1x16x8xbf16>
    tpu.vector_store %arg7[%c0_14, %c0_15, %c0_16], %26 {strides = array<i32>} : memref<4x16x8xbf16, #tpu.memory_space<vmem>>, vector<1x16x8xbf16>,
    %27 = vector.extract_strided_slice %6 {offsets = [0, 8], sizes = [16, 8], strides = [1, 1]} : vector<16x128xf32> to vector<16x8xf32>
    %28 = arith.truncf %27 : vector<16x8xf32> to vector<16x8xbf16>
    %c1 = arith.constant 1 : index
    %c0_17 = arith.constant 0 : index
    %c0_18 = arith.constant 0 : index
    %29 = vector.load %arg4[%c1, %c0_17, %c0_18] : memref<4x16x8xbf16, #tpu.memory_space<vmem>>, vector<1x16x8xbf16>
    %30 = vector.shape_cast %29 : vector<1x16x8xbf16> to vector<16x8xbf16>
    %31 = vector.shape_cast %28 : vector<16x8xbf16> to vector<1x16x8xbf16>
    tpu.vector_store %arg4[%c1, %c0_17, %c0_18], %31 {strides = array<i32>} : memref<4x16x8xbf16, #tpu.memory_space<vmem>>, vector<1x16x8xbf16>,
    %32 = vector.extract_strided_slice %6 {offsets = [0, 40], sizes = [16, 8], strides = [1, 1]} : vector<16x128xf32> to vector<16x8xf32>
    %33 = arith.truncf %32 : vector<16x8xf32> to vector<16x8xbf16>
    %c1_19 = arith.constant 1 : index
    %c0_20 = arith.constant 0 : index
    %c0_21 = arith.constant 0 : index
    %34 = vector.load %arg5[%c1_19, %c0_20, %c0_21] : memref<4x16x8xbf16, #tpu.memory_space<vmem>>, vector<1x16x8xbf16>
    %35 = vector.shape_cast %34 : vector<1x16x8xbf16> to vector<16x8xbf16>
    %36 = vector.shape_cast %33 : vector<16x8xbf16> to vector<1x16x8xbf16>
    tpu.vector_store %arg5[%c1_19, %c0_20, %c0_21], %36 {strides = array<i32>} : memref<4x16x8xbf16, #tpu.memory_space<vmem>>, vector<1x16x8xbf16>,
    %37 = vector.extract_strided_slice %6 {offsets = [0, 72], sizes = [16, 8], strides = [1, 1]} : vector<16x128xf32> to vector<16x8xf32>
    %38 = arith.truncf %37 : vector<16x8xf32> to vector<16x8xbf16>
    %c1_22 = arith.constant 1 : index
    %c0_23 = arith.constant 0 : index
    %c0_24 = arith.constant 0 : index
    %39 = vector.load %arg6[%c1_22, %c0_23, %c0_24] : memref<4x16x8xbf16, #tpu.memory_space<vmem>>, vector<1x16x8xbf16>
    %40 = vector.shape_cast %39 : vector<1x16x8xbf16> to vector<16x8xbf16>
    %41 = vector.shape_cast %38 : vector<16x8xbf16> to vector<1x16x8xbf16>
    tpu.vector_store %arg6[%c1_22, %c0_23, %c0_24], %41 {strides = array<i32>} : memref<4x16x8xbf16, #tpu.memory_space<vmem>>, vector<1x16x8xbf16>,
    %42 = vector.extract_strided_slice %6 {offsets = [0, 104], sizes = [16, 8], strides = [1, 1]} : vector<16x128xf32> to vector<16x8xf32>
    %43 = arith.truncf %42 : vector<16x8xf32> to vector<16x8xbf16>
    %c1_25 = arith.constant 1 : index
    %c0_26 = arith.constant 0 : index
    %c0_27 = arith.constant 0 : index
    %44 = vector.load %arg7[%c1_25, %c0_26, %c0_27] : memref<4x16x8xbf16, #tpu.memory_space<vmem>>, vector<1x16x8xbf16>
    %45 = vector.shape_cast %44 : vector<1x16x8xbf16> to vector<16x8xbf16>
    %46 = vector.shape_cast %43 : vector<16x8xbf16> to vector<1x16x8xbf16>
    tpu.vector_store %arg7[%c1_25, %c0_26, %c0_27], %46 {strides = array<i32>} : memref<4x16x8xbf16, #tpu.memory_space<vmem>>, vector<1x16x8xbf16>,
    %47 = vector.extract_strided_slice %6 {offsets = [0, 16], sizes = [16, 8], strides = [1, 1]} : vector<16x128xf32> to vector<16x8xf32>
    %48 = arith.truncf %47 : vector<16x8xf32> to vector<16x8xbf16>
    %c2 = arith.constant 2 : index
    %c0_28 = arith.constant 0 : index
    %c0_29 = arith.constant 0 : index
    %49 = vector.load %arg4[%c2, %c0_28, %c0_29] : memref<4x16x8xbf16, #tpu.memory_space<vmem>>, vector<1x16x8xbf16>
    %50 = vector.shape_cast %49 : vector<1x16x8xbf16> to vector<16x8xbf16>
    %51 = vector.shape_cast %48 : vector<16x8xbf16> to vector<1x16x8xbf16>
    tpu.vector_store %arg4[%c2, %c0_28, %c0_29], %51 {strides = array<i32>} : memref<4x16x8xbf16, #tpu.memory_space<vmem>>, vector<1x16x8xbf16>,
    %52 = vector.extract_strided_slice %6 {offsets = [0, 48], sizes = [16, 8], strides = [1, 1]} : vector<16x128xf32> to vector<16x8xf32>
    %53 = arith.truncf %52 : vector<16x8xf32> to vector<16x8xbf16>
    %c2_30 = arith.constant 2 : index
    %c0_31 = arith.constant 0 : index
    %c0_32 = arith.constant 0 : index
    %54 = vector.load %arg5[%c2_30, %c0_31, %c0_32] : memref<4x16x8xbf16, #tpu.memory_space<vmem>>, vector<1x16x8xbf16>
    %55 = vector.shape_cast %54 : vector<1x16x8xbf16> to vector<16x8xbf16>
    %56 = vector.shape_cast %53 : vector<16x8xbf16> to vector<1x16x8xbf16>
    tpu.vector_store %arg5[%c2_30, %c0_31, %c0_32], %56 {strides = array<i32>} : memref<4x16x8xbf16, #tpu.memory_space<vmem>>, vector<1x16x8xbf16>,
    %57 = vector.extract_strided_slice %6 {offsets = [0, 80], sizes = [16, 8], strides = [1, 1]} : vector<16x128xf32> to vector<16x8xf32>
    %58 = arith.truncf %57 : vector<16x8xf32> to vector<16x8xbf16>
    %c2_33 = arith.constant 2 : index
    %c0_34 = arith.constant 0 : index
    %c0_35 = arith.constant 0 : index
    %59 = vector.load %arg6[%c2_33, %c0_34, %c0_35] : memref<4x16x8xbf16, #tpu.memory_space<vmem>>, vector<1x16x8xbf16>
    %60 = vector.shape_cast %59 : vector<1x16x8xbf16> to vector<16x8xbf16>
    %61 = vector.shape_cast %58 : vector<16x8xbf16> to vector<1x16x8xbf16>
    tpu.vector_store %arg6[%c2_33, %c0_34, %c0_35], %61 {strides = array<i32>} : memref<4x16x8xbf16, #tpu.memory_space<vmem>>, vector<1x16x8xbf16>,
    %62 = vector.extract_strided_slice %6 {offsets = [0, 112], sizes = [16, 8], strides = [1, 1]} : vector<16x128xf32> to vector<16x8xf32>
    %63 = arith.truncf %62 : vector<16x8xf32> to vector<16x8xbf16>
    %c2_36 = arith.constant 2 : index
    %c0_37 = arith.constant 0 : index
    %c0_38 = arith.constant 0 : index
    %64 = vector.load %arg7[%c2_36, %c0_37, %c0_38] : memref<4x16x8xbf16, #tpu.memory_space<vmem>>, vector<1x16x8xbf16>
    %65 = vector.shape_cast %64 : vector<1x16x8xbf16> to vector<16x8xbf16>
    %66 = vector.shape_cast %63 : vector<16x8xbf16> to vector<1x16x8xbf16>
    tpu.vector_store %arg7[%c2_36, %c0_37, %c0_38], %66 {strides = array<i32>} : memref<4x16x8xbf16, #tpu.memory_space<vmem>>, vector<1x16x8xbf16>,
    %67 = vector.extract_strided_slice %6 {offsets = [0, 24], sizes = [16, 8], strides = [1, 1]} : vector<16x128xf32> to vector<16x8xf32>
    %68 = arith.truncf %67 : vector<16x8xf32> to vector<16x8xbf16>
    %c3 = arith.constant 3 : index
    %c0_39 = arith.constant 0 : index
    %c0_40 = arith.constant 0 : index
    %69 = vector.load %arg4[%c3, %c0_39, %c0_40] : memref<4x16x8xbf16, #tpu.memory_space<vmem>>, vector<1x16x8xbf16>
    %70 = vector.shape_cast %69 : vector<1x16x8xbf16> to vector<16x8xbf16>
    %71 = vector.shape_cast %68 : vector<16x8xbf16> to vector<1x16x8xbf16>
    tpu.vector_store %arg4[%c3, %c0_39, %c0_40], %71 {strides = array<i32>} : memref<4x16x8xbf16, #tpu.memory_space<vmem>>, vector<1x16x8xbf16>,
    %72 = vector.extract_strided_slice %6 {offsets = [0, 56], sizes = [16, 8], strides = [1, 1]} : vector<16x128xf32> to vector<16x8xf32>
    %73 = arith.truncf %72 : vector<16x8xf32> to vector<16x8xbf16>
    %c3_41 = arith.constant 3 : index
    %c0_42 = arith.constant 0 : index
    %c0_43 = arith.constant 0 : index
    %74 = vector.load %arg5[%c3_41, %c0_42, %c0_43] : memref<4x16x8xbf16, #tpu.memory_space<vmem>>, vector<1x16x8xbf16>
    %75 = vector.shape_cast %74 : vector<1x16x8xbf16> to vector<16x8xbf16>
    %76 = vector.shape_cast %73 : vector<16x8xbf16> to vector<1x16x8xbf16>
    tpu.vector_store %arg5[%c3_41, %c0_42, %c0_43], %76 {strides = array<i32>} : memref<4x16x8xbf16, #tpu.memory_space<vmem>>, vector<1x16x8xbf16>,
    %77 = vector.extract_strided_slice %6 {offsets = [0, 88], sizes = [16, 8], strides = [1, 1]} : vector<16x128xf32> to vector<16x8xf32>
    %78 = arith.truncf %77 : vector<16x8xf32> to vector<16x8xbf16>
    %c3_44 = arith.constant 3 : index
    %c0_45 = arith.constant 0 : index
    %c0_46 = arith.constant 0 : index
    %79 = vector.load %arg6[%c3_44, %c0_45, %c0_46] : memref<4x16x8xbf16, #tpu.memory_space<vmem>>, vector<1x16x8xbf16>
    %80 = vector.shape_cast %79 : vector<1x16x8xbf16> to vector<16x8xbf16>
    %81 = vector.shape_cast %78 : vector<16x8xbf16> to vector<1x16x8xbf16>
    tpu.vector_store %arg6[%c3_44, %c0_45, %c0_46], %81 {strides = array<i32>} : memref<4x16x8xbf16, #tpu.memory_space<vmem>>, vector<1x16x8xbf16>,
    %82 = vector.extract_strided_slice %6 {offsets = [0, 120], sizes = [16, 8], strides = [1, 1]} : vector<16x128xf32> to vector<16x8xf32>
    %83 = arith.truncf %82 : vector<16x8xf32> to vector<16x8xbf16>
    %c3_47 = arith.constant 3 : index
    %c0_48 = arith.constant 0 : index
    %c0_49 = arith.constant 0 : index
    %84 = vector.load %arg7[%c3_47, %c0_48, %c0_49] : memref<4x16x8xbf16, #tpu.memory_space<vmem>>, vector<1x16x8xbf16>
    %85 = vector.shape_cast %84 : vector<1x16x8xbf16> to vector<16x8xbf16>
    %86 = vector.shape_cast %83 : vector<16x8xbf16> to vector<1x16x8xbf16>
    tpu.vector_store %arg7[%c3_47, %c0_48, %c0_49], %86 {strides = array<i32>} : memref<4x16x8xbf16, #tpu.memory_space<vmem>>, vector<1x16x8xbf16>,
    return
  }
  func.func @transform_0(%arg0: i32) -> (i32, i32) {
    %c0_i32 = arith.constant 0 : i32
    %c0_i32_0 = arith.constant 0 : i32
    return %arg0, %c0_i32 : i32, i32
  }
  func.func @transform_1(%arg0: i32) -> (i32, i32) {
    %c0_i32 = arith.constant 0 : i32
    %c0_i32_0 = arith.constant 0 : i32
    %c0_i32_1 = arith.constant 0 : i32
    return %c0_i32, %c0_i32_0 : i32, i32
  }
  func.func @transform_2(%arg0: i32) -> (i32, i32) {
    %c0_i32 = arith.constant 0 : i32
    %c0_i32_0 = arith.constant 0 : i32
    %c0_i32_1 = arith.constant 0 : i32
    return %c0_i32, %c0_i32_0 : i32, i32
  }
  func.func @transform_3(%arg0: i32) -> (i32, i32, i32) {
    %c0_i32 = arith.constant 0 : i32
    %c0_i32_0 = arith.constant 0 : i32
    %c0_i32_1 = arith.constant 0 : i32
    return %c0_i32, %arg0, %c0_i32_0 : i32, i32, i32
  }
  func.func @transform_4(%arg0: i32) -> (i32, i32, i32) {
    %c0_i32 = arith.constant 0 : i32
    %c0_i32_0 = arith.constant 0 : i32
    %c0_i32_1 = arith.constant 0 : i32
    return %c0_i32, %arg0, %c0_i32_0 : i32, i32, i32
  }
  func.func @transform_5(%arg0: i32) -> (i32, i32, i32) {
    %c0_i32 = arith.constant 0 : i32
    %c0_i32_0 = arith.constant 0 : i32
    %c0_i32_1 = arith.constant 0 : i32
    return %c0_i32, %arg0, %c0_i32_0 : i32, i32, i32
  }
  func.func @transform_6(%arg0: i32) -> (i32, i32, i32) {
    %c0_i32 = arith.constant 0 : i32
    %c0_i32_0 = arith.constant 0 : i32
    %c0_i32_1 = arith.constant 0 : i32
    return %c0_i32, %arg0, %c0_i32_0 : i32, i32, i32
  }
}

module attributes {stable_mosaic.version = 11 : i64} {
  func.func @_oproj_add_ln_kernel(%arg0: i32, %arg1: memref<4x16x8xbf16, #tpu.memory_space<vmem>>, %arg2: memref<16x32xf32, #tpu.memory_space<vmem>>, %arg3: memref<4x8x32xbf16, #tpu.memory_space<vmem>>, %arg4: memref<1x32xf32, #tpu.memory_space<vmem>>, %arg5: memref<1x32xf32, #tpu.memory_space<vmem>>, %arg6: memref<1x32xf32, #tpu.memory_space<vmem>>, %arg7: memref<16x32xf32, #tpu.memory_space<vmem>>) attributes {dimension_semantics = [#tpu.dimension_semantics<parallel>], iteration_bounds = array<i64: 1>, scalar_prefetch = 0 : i64, scratch_operands = 0 : i64, tpu.core_type = #tpu.core_type<tc>, window_params = [{transform_indices = @transform_0, window_bounds = array<i64: 4, 16, 8>}, {transform_indices = @transform_1, window_bounds = array<i64: 16, 32>}, {pipeline_mode = #tpu.pipeline_mode<synchronous>, transform_indices = @transform_2, window_bounds = array<i64: 4, 8, 32>}, {pipeline_mode = #tpu.pipeline_mode<synchronous>, transform_indices = @transform_3, window_bounds = array<i64: 1, 32>}, {pipeline_mode = #tpu.pipeline_mode<synchronous>, transform_indices = @transform_4, window_bounds = array<i64: 1, 32>}, {pipeline_mode = #tpu.pipeline_mode<synchronous>, transform_indices = @transform_5, window_bounds = array<i64: 1, 32>}, {transform_indices = @transform_6, window_bounds = array<i64: 16, 32>}]} {
    %c0 = arith.constant 0 : index
    %c0_0 = arith.constant 0 : index
    %c0_1 = arith.constant 0 : index
    %0 = vector.load %arg1[%c0, %c0_0, %c0_1] : memref<4x16x8xbf16, #tpu.memory_space<vmem>>, vector<1x16x8xbf16>
    %1 = vector.shape_cast %0 : vector<1x16x8xbf16> to vector<16x8xbf16>
    %c0_2 = arith.constant 0 : index
    %c0_3 = arith.constant 0 : index
    %c0_4 = arith.constant 0 : index
    %2 = vector.load %arg3[%c0_2, %c0_3, %c0_4] : memref<4x8x32xbf16, #tpu.memory_space<vmem>>, vector<1x8x32xbf16>
    %3 = vector.shape_cast %2 : vector<1x8x32xbf16> to vector<8x32xbf16>
    %cst = arith.constant dense<0.000000e+00> : vector<16x32xf32>
    %4 = tpu.matmul %1, %3, %cst {dimension_numbers = #tpu.dot_dimension_numbers<[1], [0], [0], [1], [0, 0, 1, 1], [], []>} : vector<16x8xbf16>, vector<8x32xbf16>, vector<16x32xf32> -> vector<16x32xf32>
    %c1 = arith.constant 1 : index
    %c0_5 = arith.constant 0 : index
    %c0_6 = arith.constant 0 : index
    %5 = vector.load %arg1[%c1, %c0_5, %c0_6] : memref<4x16x8xbf16, #tpu.memory_space<vmem>>, vector<1x16x8xbf16>
    %6 = vector.shape_cast %5 : vector<1x16x8xbf16> to vector<16x8xbf16>
    %c1_7 = arith.constant 1 : index
    %c0_8 = arith.constant 0 : index
    %c0_9 = arith.constant 0 : index
    %7 = vector.load %arg3[%c1_7, %c0_8, %c0_9] : memref<4x8x32xbf16, #tpu.memory_space<vmem>>, vector<1x8x32xbf16>
    %8 = vector.shape_cast %7 : vector<1x8x32xbf16> to vector<8x32xbf16>
    %cst_10 = arith.constant dense<0.000000e+00> : vector<16x32xf32>
    %9 = tpu.matmul %6, %8, %cst_10 {dimension_numbers = #tpu.dot_dimension_numbers<[1], [0], [0], [1], [0, 0, 1, 1], [], []>} : vector<16x8xbf16>, vector<8x32xbf16>, vector<16x32xf32> -> vector<16x32xf32>
    %10 = arith.addf %4, %9 : vector<16x32xf32>
    %c2 = arith.constant 2 : index
    %c0_11 = arith.constant 0 : index
    %c0_12 = arith.constant 0 : index
    %11 = vector.load %arg1[%c2, %c0_11, %c0_12] : memref<4x16x8xbf16, #tpu.memory_space<vmem>>, vector<1x16x8xbf16>
    %12 = vector.shape_cast %11 : vector<1x16x8xbf16> to vector<16x8xbf16>
    %c2_13 = arith.constant 2 : index
    %c0_14 = arith.constant 0 : index
    %c0_15 = arith.constant 0 : index
    %13 = vector.load %arg3[%c2_13, %c0_14, %c0_15] : memref<4x8x32xbf16, #tpu.memory_space<vmem>>, vector<1x8x32xbf16>
    %14 = vector.shape_cast %13 : vector<1x8x32xbf16> to vector<8x32xbf16>
    %cst_16 = arith.constant dense<0.000000e+00> : vector<16x32xf32>
    %15 = tpu.matmul %12, %14, %cst_16 {dimension_numbers = #tpu.dot_dimension_numbers<[1], [0], [0], [1], [0, 0, 1, 1], [], []>} : vector<16x8xbf16>, vector<8x32xbf16>, vector<16x32xf32> -> vector<16x32xf32>
    %16 = arith.addf %10, %15 : vector<16x32xf32>
    %c3 = arith.constant 3 : index
    %c0_17 = arith.constant 0 : index
    %c0_18 = arith.constant 0 : index
    %17 = vector.load %arg1[%c3, %c0_17, %c0_18] : memref<4x16x8xbf16, #tpu.memory_space<vmem>>, vector<1x16x8xbf16>
    %18 = vector.shape_cast %17 : vector<1x16x8xbf16> to vector<16x8xbf16>
    %c3_19 = arith.constant 3 : index
    %c0_20 = arith.constant 0 : index
    %c0_21 = arith.constant 0 : index
    %19 = vector.load %arg3[%c3_19, %c0_20, %c0_21] : memref<4x8x32xbf16, #tpu.memory_space<vmem>>, vector<1x8x32xbf16>
    %20 = vector.shape_cast %19 : vector<1x8x32xbf16> to vector<8x32xbf16>
    %cst_22 = arith.constant dense<0.000000e+00> : vector<16x32xf32>
    %21 = tpu.matmul %18, %20, %cst_22 {dimension_numbers = #tpu.dot_dimension_numbers<[1], [0], [0], [1], [0, 0, 1, 1], [], []>} : vector<16x8xbf16>, vector<8x32xbf16>, vector<16x32xf32> -> vector<16x32xf32>
    %22 = arith.addf %16, %21 : vector<16x32xf32>
    %c0_23 = arith.constant 0 : index
    %c0_24 = arith.constant 0 : index
    %23 = vector.load %arg4[%c0_23, %c0_24] : memref<1x32xf32, #tpu.memory_space<vmem>>, vector<1x32xf32>
    %24 = vector.broadcast %23 : vector<1x32xf32> to vector<16x32xf32>
    %25 = arith.addf %22, %24 : vector<16x32xf32>
    %c0_25 = arith.constant 0 : index
    %c0_26 = arith.constant 0 : index
    %26 = vector.load %arg2[%c0_25, %c0_26] : memref<16x32xf32, #tpu.memory_space<vmem>>, vector<16x32xf32>
    %27 = arith.addf %25, %26 : vector<16x32xf32>
    %cst_27 = arith.constant dense<0.000000e+00> : vector<16xf32>
    %28 = vector.multi_reduction <add>, %27, %cst_27 [1] : vector<16x32xf32> to vector<16xf32>
    %29 = vector.shape_cast %28 : vector<16xf32> to vector<16x1xf32>
    %cst_28 = arith.constant 3.125000e-02 : f32
    %30 = vector.broadcast %cst_28 : f32 to vector<16x1xf32>
    %31 = arith.mulf %29, %30 : vector<16x1xf32>
    %32 = arith.mulf %27, %27 : vector<16x32xf32>
    %cst_29 = arith.constant dense<0.000000e+00> : vector<16xf32>
    %33 = vector.multi_reduction <add>, %32, %cst_29 [1] : vector<16x32xf32> to vector<16xf32>
    %34 = vector.shape_cast %33 : vector<16xf32> to vector<16x1xf32>
    %cst_30 = arith.constant 3.125000e-02 : f32
    %35 = vector.broadcast %cst_30 : f32 to vector<16x1xf32>
    %36 = arith.mulf %34, %35 : vector<16x1xf32>
    %37 = arith.mulf %31, %31 : vector<16x1xf32>
    %38 = arith.subf %36, %37 : vector<16x1xf32>
    %cst_31 = arith.constant 0.000000e+00 : f32
    %39 = vector.broadcast %cst_31 : f32 to vector<16x1xf32>
    %40 = arith.maximumf %38, %39 : vector<16x1xf32>
    %41 = vector.broadcast %31 : vector<16x1xf32> to vector<16x32xf32>
    %42 = arith.subf %27, %41 : vector<16x32xf32>
    %cst_32 = arith.constant 9.99999974E-6 : f32
    %43 = vector.broadcast %cst_32 : f32 to vector<16x1xf32>
    %44 = arith.addf %40, %43 : vector<16x1xf32>
    %45 = math.rsqrt %44 : vector<16x1xf32>
    %46 = vector.broadcast %45 : vector<16x1xf32> to vector<16x32xf32>
    %47 = arith.mulf %42, %46 : vector<16x32xf32>
    %c0_33 = arith.constant 0 : index
    %c0_34 = arith.constant 0 : index
    %48 = vector.load %arg5[%c0_33, %c0_34] : memref<1x32xf32, #tpu.memory_space<vmem>>, vector<1x32xf32>
    %49 = vector.broadcast %48 : vector<1x32xf32> to vector<16x32xf32>
    %50 = arith.mulf %47, %49 : vector<16x32xf32>
    %c0_35 = arith.constant 0 : index
    %c0_36 = arith.constant 0 : index
    %51 = vector.load %arg6[%c0_35, %c0_36] : memref<1x32xf32, #tpu.memory_space<vmem>>, vector<1x32xf32>
    %52 = vector.broadcast %51 : vector<1x32xf32> to vector<16x32xf32>
    %53 = arith.addf %50, %52 : vector<16x32xf32>
    %c0_37 = arith.constant 0 : index
    %c0_38 = arith.constant 0 : index
    %54 = vector.load %arg7[%c0_37, %c0_38] : memref<16x32xf32, #tpu.memory_space<vmem>>, vector<16x32xf32>
    tpu.vector_store %arg7[%c0_37, %c0_38], %53 {strides = array<i32>} : memref<16x32xf32, #tpu.memory_space<vmem>>, vector<16x32xf32>,
    return
  }
  func.func @transform_0(%arg0: i32) -> (i32, i32, i32) {
    %c0_i32 = arith.constant 0 : i32
    %c0_i32_0 = arith.constant 0 : i32
    %c0_i32_1 = arith.constant 0 : i32
    return %c0_i32, %arg0, %c0_i32_0 : i32, i32, i32
  }
  func.func @transform_1(%arg0: i32) -> (i32, i32) {
    %c0_i32 = arith.constant 0 : i32
    %c0_i32_0 = arith.constant 0 : i32
    return %arg0, %c0_i32 : i32, i32
  }
  func.func @transform_2(%arg0: i32) -> (i32, i32, i32) {
    %c0_i32 = arith.constant 0 : i32
    %c0_i32_0 = arith.constant 0 : i32
    %c0_i32_1 = arith.constant 0 : i32
    %c0_i32_2 = arith.constant 0 : i32
    return %c0_i32, %c0_i32_0, %c0_i32_1 : i32, i32, i32
  }
  func.func @transform_3(%arg0: i32) -> (i32, i32) {
    %c0_i32 = arith.constant 0 : i32
    %c0_i32_0 = arith.constant 0 : i32
    %c0_i32_1 = arith.constant 0 : i32
    return %c0_i32, %c0_i32_0 : i32, i32
  }
  func.func @transform_4(%arg0: i32) -> (i32, i32) {
    %c0_i32 = arith.constant 0 : i32
    %c0_i32_0 = arith.constant 0 : i32
    %c0_i32_1 = arith.constant 0 : i32
    return %c0_i32, %c0_i32_0 : i32, i32
  }
  func.func @transform_5(%arg0: i32) -> (i32, i32) {
    %c0_i32 = arith.constant 0 : i32
    %c0_i32_0 = arith.constant 0 : i32
    %c0_i32_1 = arith.constant 0 : i32
    return %c0_i32, %c0_i32_0 : i32, i32
  }
  func.func @transform_6(%arg0: i32) -> (i32, i32) {
    %c0_i32 = arith.constant 0 : i32
    %c0_i32_0 = arith.constant 0 : i32
    return %arg0, %c0_i32 : i32, i32
  }
}

module attributes {stable_mosaic.version = 11 : i64} {
  func.func @_ffn_add_ln_kernel(%arg0: i32, %arg1: i32, %arg2: memref<16x32xf32, #tpu.memory_space<vmem>>, %arg3: memref<32x128xbf16, #tpu.memory_space<vmem>>, %arg4: memref<1x128xf32, #tpu.memory_space<vmem>>, %arg5: memref<128x32xbf16, #tpu.memory_space<vmem>>, %arg6: memref<1x32xf32, #tpu.memory_space<vmem>>, %arg7: memref<1x32xf32, #tpu.memory_space<vmem>>, %arg8: memref<1x32xf32, #tpu.memory_space<vmem>>, %arg9: memref<16x32xf32, #tpu.memory_space<vmem>>, %arg10: memref<16x32xf32, #tpu.memory_space<vmem>>) attributes {dimension_semantics = [#tpu.dimension_semantics<parallel>, #tpu.dimension_semantics<arbitrary>], iteration_bounds = array<i64: 1, 1>, scalar_prefetch = 0 : i64, scratch_operands = 1 : i64, tpu.core_type = #tpu.core_type<tc>, window_params = [{transform_indices = @transform_0, window_bounds = array<i64: 16, 32>}, {transform_indices = @transform_1, window_bounds = array<i64: 32, 128>}, {transform_indices = @transform_2, window_bounds = array<i64: 1, 128>}, {transform_indices = @transform_3, window_bounds = array<i64: 128, 32>}, {pipeline_mode = #tpu.pipeline_mode<synchronous>, transform_indices = @transform_4, window_bounds = array<i64: 1, 32>}, {pipeline_mode = #tpu.pipeline_mode<synchronous>, transform_indices = @transform_5, window_bounds = array<i64: 1, 32>}, {pipeline_mode = #tpu.pipeline_mode<synchronous>, transform_indices = @transform_6, window_bounds = array<i64: 1, 32>}, {transform_indices = @transform_7, window_bounds = array<i64: 16, 32>}]} {
    %c0_i32 = arith.constant 0 : i32
    %0 = arith.cmpi eq, %arg1, %c0_i32 : i32
    %1 = arith.extui %0 : i1 to i32
    %c0_i32_0 = arith.constant 0 : i32
    %2 = arith.cmpi ne, %1, %c0_i32_0 : i32
    scf.if %2 {
      %cst_16 = arith.constant 0.000000e+00 : f32
      %21 = vector.broadcast %cst_16 : f32 to vector<16x32xf32>
      %c0_17 = arith.constant 0 : index
      %c0_18 = arith.constant 0 : index
      %22 = vector.load %arg10[%c0_17, %c0_18] : memref<16x32xf32, #tpu.memory_space<vmem>>, vector<16x32xf32>
      tpu.vector_store %arg10[%c0_17, %c0_18], %21 {strides = array<i32>} : memref<16x32xf32, #tpu.memory_space<vmem>>, vector<16x32xf32>,
    } else {
    }
    %c0 = arith.constant 0 : index
    %c0_1 = arith.constant 0 : index
    %3 = vector.load %arg2[%c0, %c0_1] : memref<16x32xf32, #tpu.memory_space<vmem>>, vector<16x32xf32>
    %4 = arith.truncf %3 : vector<16x32xf32> to vector<16x32xbf16>
    %c0_2 = arith.constant 0 : index
    %c0_3 = arith.constant 0 : index
    %5 = vector.load %arg3[%c0_2, %c0_3] : memref<32x128xbf16, #tpu.memory_space<vmem>>, vector<32x128xbf16>
    %cst = arith.constant dense<0.000000e+00> : vector<16x128xf32>
    %6 = tpu.matmul %4, %5, %cst {dimension_numbers = #tpu.dot_dimension_numbers<[1], [0], [0], [1], [0, 0, 1, 1], [], []>} : vector<16x32xbf16>, vector<32x128xbf16>, vector<16x128xf32> -> vector<16x128xf32>
    %c0_4 = arith.constant 0 : index
    %c0_5 = arith.constant 0 : index
    %7 = vector.load %arg4[%c0_4, %c0_5] : memref<1x128xf32, #tpu.memory_space<vmem>>, vector<1x128xf32>
    %8 = vector.broadcast %7 : vector<1x128xf32> to vector<16x128xf32>
    %9 = arith.addf %6, %8 : vector<16x128xf32>
    %cst_6 = arith.constant 0.000000e+00 : f32
    %10 = vector.broadcast %cst_6 : f32 to vector<16x128xf32>
    %11 = arith.maximumf %9, %10 : vector<16x128xf32>
    %12 = arith.truncf %11 : vector<16x128xf32> to vector<16x128xbf16>
    %c0_7 = arith.constant 0 : index
    %c0_8 = arith.constant 0 : index
    %13 = vector.load %arg10[%c0_7, %c0_8] : memref<16x32xf32, #tpu.memory_space<vmem>>, vector<16x32xf32>
    %c0_9 = arith.constant 0 : index
    %c0_10 = arith.constant 0 : index
    %14 = vector.load %arg5[%c0_9, %c0_10] : memref<128x32xbf16, #tpu.memory_space<vmem>>, vector<128x32xbf16>
    %cst_11 = arith.constant dense<0.000000e+00> : vector<16x32xf32>
    %15 = tpu.matmul %12, %14, %cst_11 {dimension_numbers = #tpu.dot_dimension_numbers<[1], [0], [0], [1], [0, 0, 1, 1], [], []>} : vector<16x128xbf16>, vector<128x32xbf16>, vector<16x32xf32> -> vector<16x32xf32>
    %16 = arith.addf %13, %15 : vector<16x32xf32>
    %c0_12 = arith.constant 0 : index
    %c0_13 = arith.constant 0 : index
    %17 = vector.load %arg10[%c0_12, %c0_13] : memref<16x32xf32, #tpu.memory_space<vmem>>, vector<16x32xf32>
    tpu.vector_store %arg10[%c0_12, %c0_13], %16 {strides = array<i32>} : memref<16x32xf32, #tpu.memory_space<vmem>>, vector<16x32xf32>,
    %c0_i32_14 = arith.constant 0 : i32
    %18 = arith.cmpi eq, %arg1, %c0_i32_14 : i32
    %19 = arith.extui %18 : i1 to i32
    %c0_i32_15 = arith.constant 0 : i32
    %20 = arith.cmpi ne, %19, %c0_i32_15 : i32
    scf.if %20 {
      %c0_16 = arith.constant 0 : index
      %c0_17 = arith.constant 0 : index
      %21 = vector.load %arg10[%c0_16, %c0_17] : memref<16x32xf32, #tpu.memory_space<vmem>>, vector<16x32xf32>
      %c0_18 = arith.constant 0 : index
      %c0_19 = arith.constant 0 : index
      %22 = vector.load %arg6[%c0_18, %c0_19] : memref<1x32xf32, #tpu.memory_space<vmem>>, vector<1x32xf32>
      %23 = vector.broadcast %22 : vector<1x32xf32> to vector<16x32xf32>
      %24 = arith.addf %21, %23 : vector<16x32xf32>
      %c0_20 = arith.constant 0 : index
      %c0_21 = arith.constant 0 : index
      %25 = vector.load %arg2[%c0_20, %c0_21] : memref<16x32xf32, #tpu.memory_space<vmem>>, vector<16x32xf32>
      %26 = arith.addf %24, %25 : vector<16x32xf32>
      %cst_22 = arith.constant dense<0.000000e+00> : vector<16xf32>
      %27 = vector.multi_reduction <add>, %26, %cst_22 [1] : vector<16x32xf32> to vector<16xf32>
      %28 = vector.shape_cast %27 : vector<16xf32> to vector<16x1xf32>
      %cst_23 = arith.constant 3.125000e-02 : f32
      %29 = vector.broadcast %cst_23 : f32 to vector<16x1xf32>
      %30 = arith.mulf %28, %29 : vector<16x1xf32>
      %31 = arith.mulf %26, %26 : vector<16x32xf32>
      %cst_24 = arith.constant dense<0.000000e+00> : vector<16xf32>
      %32 = vector.multi_reduction <add>, %31, %cst_24 [1] : vector<16x32xf32> to vector<16xf32>
      %33 = vector.shape_cast %32 : vector<16xf32> to vector<16x1xf32>
      %cst_25 = arith.constant 3.125000e-02 : f32
      %34 = vector.broadcast %cst_25 : f32 to vector<16x1xf32>
      %35 = arith.mulf %33, %34 : vector<16x1xf32>
      %36 = arith.mulf %30, %30 : vector<16x1xf32>
      %37 = arith.subf %35, %36 : vector<16x1xf32>
      %cst_26 = arith.constant 0.000000e+00 : f32
      %38 = vector.broadcast %cst_26 : f32 to vector<16x1xf32>
      %39 = arith.maximumf %37, %38 : vector<16x1xf32>
      %40 = vector.broadcast %30 : vector<16x1xf32> to vector<16x32xf32>
      %41 = arith.subf %26, %40 : vector<16x32xf32>
      %cst_27 = arith.constant 9.99999974E-6 : f32
      %42 = vector.broadcast %cst_27 : f32 to vector<16x1xf32>
      %43 = arith.addf %39, %42 : vector<16x1xf32>
      %44 = math.rsqrt %43 : vector<16x1xf32>
      %45 = vector.broadcast %44 : vector<16x1xf32> to vector<16x32xf32>
      %46 = arith.mulf %41, %45 : vector<16x32xf32>
      %c0_28 = arith.constant 0 : index
      %c0_29 = arith.constant 0 : index
      %47 = vector.load %arg7[%c0_28, %c0_29] : memref<1x32xf32, #tpu.memory_space<vmem>>, vector<1x32xf32>
      %48 = vector.broadcast %47 : vector<1x32xf32> to vector<16x32xf32>
      %49 = arith.mulf %46, %48 : vector<16x32xf32>
      %c0_30 = arith.constant 0 : index
      %c0_31 = arith.constant 0 : index
      %50 = vector.load %arg8[%c0_30, %c0_31] : memref<1x32xf32, #tpu.memory_space<vmem>>, vector<1x32xf32>
      %51 = vector.broadcast %50 : vector<1x32xf32> to vector<16x32xf32>
      %52 = arith.addf %49, %51 : vector<16x32xf32>
      %c0_32 = arith.constant 0 : index
      %c0_33 = arith.constant 0 : index
      %53 = vector.load %arg9[%c0_32, %c0_33] : memref<16x32xf32, #tpu.memory_space<vmem>>, vector<16x32xf32>
      tpu.vector_store %arg9[%c0_32, %c0_33], %52 {strides = array<i32>} : memref<16x32xf32, #tpu.memory_space<vmem>>, vector<16x32xf32>,
    } else {
    }
    return
  }
  func.func @transform_0(%arg0: i32, %arg1: i32) -> (i32, i32) {
    %c0_i32 = arith.constant 0 : i32
    %c0_i32_0 = arith.constant 0 : i32
    return %arg0, %c0_i32 : i32, i32
  }
  func.func @transform_1(%arg0: i32, %arg1: i32) -> (i32, i32) {
    %c0_i32 = arith.constant 0 : i32
    %c0_i32_0 = arith.constant 0 : i32
    return %c0_i32, %arg1 : i32, i32
  }
  func.func @transform_2(%arg0: i32, %arg1: i32) -> (i32, i32) {
    %c0_i32 = arith.constant 0 : i32
    %c0_i32_0 = arith.constant 0 : i32
    return %c0_i32, %arg1 : i32, i32
  }
  func.func @transform_3(%arg0: i32, %arg1: i32) -> (i32, i32) {
    %c0_i32 = arith.constant 0 : i32
    %c0_i32_0 = arith.constant 0 : i32
    return %arg1, %c0_i32 : i32, i32
  }
  func.func @transform_4(%arg0: i32, %arg1: i32) -> (i32, i32) {
    %c0_i32 = arith.constant 0 : i32
    %c0_i32_0 = arith.constant 0 : i32
    %c0_i32_1 = arith.constant 0 : i32
    return %c0_i32, %c0_i32_0 : i32, i32
  }
  func.func @transform_5(%arg0: i32, %arg1: i32) -> (i32, i32) {
    %c0_i32 = arith.constant 0 : i32
    %c0_i32_0 = arith.constant 0 : i32
    %c0_i32_1 = arith.constant 0 : i32
    return %c0_i32, %c0_i32_0 : i32, i32
  }
  func.func @transform_6(%arg0: i32, %arg1: i32) -> (i32, i32) {
    %c0_i32 = arith.constant 0 : i32
    %c0_i32_0 = arith.constant 0 : i32
    %c0_i32_1 = arith.constant 0 : i32
    return %c0_i32, %c0_i32_0 : i32, i32
  }
  func.func @transform_7(%arg0: i32, %arg1: i32) -> (i32, i32) {
    %c0_i32 = arith.constant 0 : i32
    %c0_i32_0 = arith.constant 0 : i32
    return %arg0, %c0_i32 : i32, i32
  }
}

</mosaic_0001>

<llo_original>
// kernel: tp_decoder_layer_forward.4
$region0: #{tp_decoder_layer_forward.4}
  #allocation0 [shape = 'u32[]', space=smem, size = 0x4, offset = 0x4, fixed_abs, tag = 'smem constant byte address 0x4 - core index']
  #allocation1 [shape = 'u32[72,128]{1,0:T(1,128)}', space=vmem, size = 0x9000, scoped, tag = 'internal scratch']
  %s0 = inlined_call_operand.hbm [shape: f32[16,32], index: 0, kind: input, shape index: {}]
  %s1 = inlined_call_operand.hbm [shape: bf16[32,128], index: 1, kind: input, shape index: {}]
  %s2 = inlined_call_operand.vmem [shape: f32[1,128], index: 2, kind: input, shape index: {}]
  %s3 = inlined_call_operand.vmem [shape: bf16[4,16,8], index: 3, kind: output, shape index: {0}]
  %s4 = inlined_call_operand.vmem [shape: bf16[4,16,8], index: 4, kind: output, shape index: {1}]
  %s5 = inlined_call_operand.vmem [shape: bf16[4,16,8], index: 5, kind: output, shape index: {2}]
  %s6 = inlined_call_operand.vmem [shape: bf16[4,16,8], index: 6, kind: output, shape index: {3}]
  %7 = xla_tuple %s3, %s4, %s5, %s6
  %s8 = sld [smem:[#allocation0]]
  $region54: #{tp_decoder_layer_forward.4} parent=0
    _
  %s10 = ssub.s32 1, %s8
  %s11 = scalar_select 0, %s10, %s8
  $region1: #{tp_decoder_layer_forward.4} parent=0
    #allocation2 [shape = 'u8[8192]{0}', space=vmem, size = 0x2000, scoped, tag = 'input window, operand 0, single buffered']
    #allocation3 [shape = 's32[1]{0}', space=sflag, size = 0x4, scoped, tag = 'scoped memory for tp_decoder_layer_forward.4']
    #allocation4 [shape = 'u8[8192]{0}', space=vmem, size = 0x2000, scoped, tag = 'input window, operand 1, single buffered']
    #allocation5 [shape = 's32[1]{0}', space=sflag, size = 0x4, scoped, tag = 'scoped memory for tp_decoder_layer_forward.4']
    %12 = vsyncpa [#allocation3], 0
    %13 = vsyncpa [#allocation5], 0
    // Predicated region
    $region2: #{tp_decoder_layer_forward.4} parent=1 // pred_check
      _
    $region3: #{tp_decoder_layer_forward.4} parent=1 // pred_check_branch
      %15 = sbr.rel (0) target = $region5
    $region4: #{tp_decoder_layer_forward.4} parent=1 // pred_region
      %17 = vsyncadd [#allocation3], 0
      %s18 = sshll.u32 %s0, 4
      %s19 = int_to_ptr.hbm [resolvable:$true] %s18
      %s20 = sshll.u32 [#allocation2], 4
      %s21 = int_to_ptr.vmem [resolvable:$true] %s20
      %26 = dma.hbm_to_vmem [thread:$0]  %s19, 256, %s21, [#allocation3], 128, 128, 8
    $region5: #{tp_decoder_layer_forward.4} parent=1 // pred_fallthru
      _
    // Predicated region
    $region6: #{tp_decoder_layer_forward.4} parent=1 // pred_check
      _
    $region7: #{tp_decoder_layer_forward.4} parent=1 // pred_check_branch
      %28 = sbr.rel (0) target = $region9
    $region8: #{tp_decoder_layer_forward.4} parent=1 // pred_region
      %30 = vsyncadd [#allocation5], 0
      %s31 = sshll.u32 %s1, 4
      %s32 = int_to_ptr.hbm [resolvable:$true] %s31
      %s33 = sshll.u32 [#allocation4], 4
      %s34 = int_to_ptr.vmem [resolvable:$true] %s33
      %39 = dma.hbm_to_vmem [thread:$0]  %s32, 256, %s34, [#allocation5], 64, 64, 4
    $region9: #{tp_decoder_layer_forward.4} parent=1 // pred_fallthru
      _
    // Predicated region
    $region10: #{tp_decoder_layer_forward.4} parent=1 // pred_check
      _
    $region11: #{tp_decoder_layer_forward.4} parent=1 // pred_check_branch
      %41 = sbr.rel (0) target = $region13
    $region12: #{tp_decoder_layer_forward.4} parent=1 // pred_region
      _
    $region13: #{tp_decoder_layer_forward.4} parent=1 // pred_fallthru
      _
    // Predicated region
    $region14: #{tp_decoder_layer_forward.4} parent=1 // pred_check
      _
    $region15: #{tp_decoder_layer_forward.4} parent=1 // pred_check_branch
      %43 = sbr.rel (0) target = $region17
    $region16: #{tp_decoder_layer_forward.4} parent=1 // pred_region
      %45 = dma.done [#allocation3], 256
    $region17: #{tp_decoder_layer_forward.4} parent=1 // pred_fallthru
      _
    // Predicated region
    $region18: #{tp_decoder_layer_forward.4} parent=1 // pred_check
      _
    $region19: #{tp_decoder_layer_forward.4} parent=1 // pred_check_branch
      %47 = sbr.rel (0) target = $region21
    $region20: #{tp_decoder_layer_forward.4} parent=1 // pred_region
      %49 = dma.done [#allocation5], 256
    $region21: #{tp_decoder_layer_forward.4} parent=1 // pred_fallthru
      _
    %v51 = vld [vmem:[#allocation2] sm:$0xff]
    %v52 = vld [vmem:[#allocation2 + $0x8] sm:$0xff]
    %v53 = vpack.c.bf16 %v52, %v51
    %v54 = vld [vmem:[#allocation4] sm:$0xf]
    %v55 = vld [vmem:[#allocation4 + $0x4] sm:$0xf]
    %v56 = vld [vmem:[#allocation4 + $0x8] sm:$0xf]
    %v57 = vld [vmem:[#allocation4 + $0xc] sm:$0xf]
    %v58 = vld [vmem:[%s2] sm:$0x1]
    %v60 = vperm.slane %v58, 0
    %v66 = vunpack.c.l.b16 %v54
    %v67 = vunpack.c.l.b16 %v55
    %v68 = vunpack.c.l.b16 %v56
    %v69 = vunpack.c.l.b16 %v57
    %v70 = vpack.c.b16 %v67, %v66
    %v71 = vpack.c.b16 %v69, %v68
    %vm74 = vcmask 261120
    %v76 = vsel %vm74, %v53, 0
    %78 = vmatpush.bf16.msra.mxu0 0
    %79 = vmatpush.bf16.msra.mxu0 0
    %80 = vmatpush.bf16.msra.mxu0 0
    %81 = vmatpush.bf16.msra.mxu0 0
    %82 = vmatpush.bf16.msra.mxu0 0
    %83 = vmatpush.bf16.msra.mxu0 0
    %84 = vmatpush.bf16.msra.mxu0 %v71
    %85 = vmatpush.bf16.msra.mxu0 %v70
    %86 = vmatmul.bf16.gmra.mxu0 %v76
    %v87 = vpop.f32.mrf.mxu0
    %v88 = vadd.f32 %v60, %v87
    %v89 = vpop.f32.mrf.mxu0
    %v90 = vadd.f32 %v60, %v89
    %91 = vdwg.mxu0
    %v92 = vpack.c.bf16 %v88, %v88
    %v93 = vpack.c.bf16 %v90, %v90
    %vm94 = vcmask 60416
    %95 = vst.msk [vmem:[%s3] sm:$0xf] %vm94, %v92
    %96 = vst.msk [vmem:[%s3 + $0x4] sm:$0xf] %vm94, %v93
    %99 = vrot.lane.b32.xlu0 %v92, 96
    %v100 = vpop.permute.xlu0 %99
    %101 = vrot.lane.b32.xlu0 %v93, 96
    %v102 = vpop.permute.xlu0 %101
    %105 = vst.msk [vmem:[%s4] sm:$0xf] %vm94, %v100
    %106 = vst.msk [vmem:[%s4 + $0x4] sm:$0xf] %vm94, %v102
    %107 = vrot.lane.b32.xlu0 %v92, 64
    %v108 = vpop.permute.xlu0 %107
    %109 = vrot.lane.b32.xlu0 %v93, 64
    %v110 = vpop.permute.xlu0 %109
    %113 = vst.msk [vmem:[%s5] sm:$0xf] %vm94, %v108
    %114 = vst.msk [vmem:[%s5 + $0x4] sm:$0xf] %vm94, %v110
    %115 = vrot.lane.b32.xlu0 %v92, 32
    %v116 = vpop.permute.xlu0 %115
    %117 = vrot.lane.b32.xlu0 %v93, 32
    %v118 = vpop.permute.xlu0 %117
    %121 = vst.msk [vmem:[%s6] sm:$0xf] %vm94, %v116
    %122 = vst.msk [vmem:[%s6 + $0x4] sm:$0xf] %vm94, %v118
    %123 = vrot.lane.b32.xlu0 %v92, 120
    %v124 = vpop.permute.xlu0 %123
    %125 = vrot.lane.b32.xlu0 %v93, 120
    %v126 = vpop.permute.xlu0 %125
    %s129 = scalar_lea.vmem %s3, 8
    %130 = vst.msk [vmem:[%s129] sm:$0xf] %vm94, %v124
    %131 = vst.msk [vmem:[%s129 + $0x4] sm:$0xf] %vm94, %v126
    %132 = vrot.lane.b32.xlu0 %v92, 88
    %v133 = vpop.permute.xlu0 %132
    %134 = vrot.lane.b32.xlu0 %v93, 88
    %v135 = vpop.permute.xlu0 %134
    %s138 = scalar_lea.vmem %s4, 8
    %139 = vst.msk [vmem:[%s138] sm:$0xf] %vm94, %v133
    %140 = vst.msk [vmem:[%s138 + $0x4] sm:$0xf] %vm94, %v135
    %141 = vrot.lane.b32.xlu0 %v92, 56
    %v142 = vpop.permute.xlu0 %141
    %143 = vrot.lane.b32.xlu0 %v93, 56
    %v144 = vpop.permute.xlu0 %143
    %s147 = scalar_lea.vmem %s5, 8
    %148 = vst.msk [vmem:[%s147] sm:$0xf] %vm94, %v142
    %149 = vst.msk [vmem:[%s147 + $0x4] sm:$0xf] %vm94, %v144
    %150 = vrot.lane.b32.xlu0 %v92, 24
    %v151 = vpop.permute.xlu0 %150
    %152 = vrot.lane.b32.xlu0 %v93, 24
    %v153 = vpop.permute.xlu0 %152
    %s156 = scalar_lea.vmem %s6, 8
    %157 = vst.msk [vmem:[%s156] sm:$0xf] %vm94, %v151
    %158 = vst.msk [vmem:[%s156 + $0x4] sm:$0xf] %vm94, %v153
    %159 = vrot.lane.b32.xlu0 %v92, 112
    %v160 = vpop.permute.xlu0 %159
    %161 = vrot.lane.b32.xlu0 %v93, 112
    %v162 = vpop.permute.xlu0 %161
    %s165 = scalar_lea.vmem %s3, 16
    %166 = vst.msk [vmem:[%s165] sm:$0xf] %vm94, %v160
    %167 = vst.msk [vmem:[%s165 + $0x4] sm:$0xf] %vm94, %v162
    %168 = vrot.lane.b32.xlu0 %v92, 80
    %v169 = vpop.permute.xlu0 %168
    %170 = vrot.lane.b32.xlu0 %v93, 80
    %v171 = vpop.permute.xlu0 %170
    %s174 = scalar_lea.vmem %s4, 16
    %175 = vst.msk [vmem:[%s174] sm:$0xf] %vm94, %v169
    %176 = vst.msk [vmem:[%s174 + $0x4] sm:$0xf] %vm94, %v171
    %177 = vrot.lane.b32.xlu0 %v92, 48
    %v178 = vpop.permute.xlu0 %177
    %179 = vrot.lane.b32.xlu0 %v93, 48
    %v180 = vpop.permute.xlu0 %179
    %s183 = scalar_lea.vmem %s5, 16
    %184 = vst.msk [vmem:[%s183] sm:$0xf] %vm94, %v178
    %185 = vst.msk [vmem:[%s183 + $0x4] sm:$0xf] %vm94, %v180
    %186 = vrot.lane.b32.xlu0 %v92, 16
    %v187 = vpop.permute.xlu0 %186
    %188 = vrot.lane.b32.xlu0 %v93, 16
    %v189 = vpop.permute.xlu0 %188
    %s192 = scalar_lea.vmem %s6, 16
    %193 = vst.msk [vmem:[%s192] sm:$0xf] %vm94, %v187
    %194 = vst.msk [vmem:[%s192 + $0x4] sm:$0xf] %vm94, %v189
    %195 = vrot.lane.b32.xlu0 %v92, 104
    %v196 = vpop.permute.xlu0 %195
    %197 = vrot.lane.b32.xlu0 %v93, 104
    %v198 = vpop.permute.xlu0 %197
    %s201 = scalar_lea.vmem %s3, 24
    %202 = vst.msk [vmem:[%s201] sm:$0xf] %vm94, %v196
    %203 = vst.msk [vmem:[%s201 + $0x4] sm:$0xf] %vm94, %v198
    %204 = vrot.lane.b32.xlu0 %v92, 72
    %v205 = vpop.permute.xlu0 %204
    %206 = vrot.lane.b32.xlu0 %v93, 72
    %v207 = vpop.permute.xlu0 %206
    %s210 = scalar_lea.vmem %s4, 24
    %211 = vst.msk [vmem:[%s210] sm:$0xf] %vm94, %v205
    %212 = vst.msk [vmem:[%s210 + $0x4] sm:$0xf] %vm94, %v207
    %213 = vrot.lane.b32.xlu0 %v92, 40
    %v214 = vpop.permute.xlu0 %213
    %215 = vrot.lane.b32.xlu0 %v93, 40
    %v216 = vpop.permute.xlu0 %215
    %s219 = scalar_lea.vmem %s5, 24
    %220 = vst.msk [vmem:[%s219] sm:$0xf] %vm94, %v214
    %221 = vst.msk [vmem:[%s219 + $0x4] sm:$0xf] %vm94, %v216
    %222 = vrot.lane.b32.xlu0 %v92, 8
    %v223 = vpop.permute.xlu0 %222
    %224 = vrot.lane.b32.xlu0 %v93, 8
    %v225 = vpop.permute.xlu0 %224
    %s228 = scalar_lea.vmem %s6, 24
    %229 = vst.msk [vmem:[%s228] sm:$0xf] %vm94, %v223
    %230 = vst.msk [vmem:[%s228 + $0x4] sm:$0xf] %vm94, %v225
    // Predicated region
    $region22: #{tp_decoder_layer_forward.4} parent=1 // pred_check
      _
    $region23: #{tp_decoder_layer_forward.4} parent=1 // pred_check_branch
      %232 = sbr.rel (0) target = $region25
    $region24: #{tp_decoder_layer_forward.4} parent=1 // pred_region
      _
    $region25: #{tp_decoder_layer_forward.4} parent=1 // pred_fallthru
      _
    // Predicated region
    $region26: #{tp_decoder_layer_forward.4} parent=1 // pred_check
      _
    $region27: #{tp_decoder_layer_forward.4} parent=1 // pred_check_branch
      %234 = sbr.rel (0) target = $region29
    $region28: #{tp_decoder_layer_forward.4} parent=1 // pred_region
      _
    $region29: #{tp_decoder_layer_forward.4} parent=1 // pred_fallthru
      _
    // Predicated region
    $region30: #{tp_decoder_layer_forward.4} parent=1 // pred_check
      _
    $region31: #{tp_decoder_layer_forward.4} parent=1 // pred_check_branch
      %236 = sbr.rel (0) target = $region33
    $region32: #{tp_decoder_layer_forward.4} parent=1 // pred_region
      _
    $region33: #{tp_decoder_layer_forward.4} parent=1 // pred_fallthru
      _
    // Predicated region
    $region34: #{tp_decoder_layer_forward.4} parent=1 // pred_check
      _
    $region35: #{tp_decoder_layer_forward.4} parent=1 // pred_check_branch
      %238 = sbr.rel (0) target = $region37
    $region36: #{tp_decoder_layer_forward.4} parent=1 // pred_region
      _
    $region37: #{tp_decoder_layer_forward.4} parent=1 // pred_fallthru
      _
    // Predicated region
    $region38: #{tp_decoder_layer_forward.4} parent=1 // pred_check
      _
    $region39: #{tp_decoder_layer_forward.4} parent=1 // pred_check_branch
      %240 = sbr.rel (0) target = $region41
    $region40: #{tp_decoder_layer_forward.4} parent=1 // pred_region
      _
    $region41: #{tp_decoder_layer_forward.4} parent=1 // pred_fallthru
      _
    // Predicated region
    $region42: #{tp_decoder_layer_forward.4} parent=1 // pred_check
      _
    $region43: #{tp_decoder_layer_forward.4} parent=1 // pred_check_branch
      %242 = sbr.rel (0) target = $region45
    $region44: #{tp_decoder_layer_forward.4} parent=1 // pred_region
      _
    $region45: #{tp_decoder_layer_forward.4} parent=1 // pred_fallthru
      _
    // Predicated region
    $region46: #{tp_decoder_layer_forward.4} parent=1 // pred_check
      _
    $region47: #{tp_decoder_layer_forward.4} parent=1 // pred_check_branch
      %244 = sbr.rel (0) target = $region49
    $region48: #{tp_decoder_layer_forward.4} parent=1 // pred_region
      _
    $region49: #{tp_decoder_layer_forward.4} parent=1 // pred_fallthru
      _
    // Predicated region
    $region50: #{tp_decoder_layer_forward.4} parent=1 // pred_check
      _
    $region51: #{tp_decoder_layer_forward.4} parent=1 // pred_check_branch
      %246 = sbr.rel (0) target = $region53
    $region52: #{tp_decoder_layer_forward.4} parent=1 // pred_region
      _
    $region53: #{tp_decoder_layer_forward.4} parent=1 // pred_fallthru
      _
    %247 = vsyncpa [#allocation3], 1
    %248 = vsyncpa [#allocation5], 1

// kernel: tp_decoder_layer_forward.6
$region0: #{tp_decoder_layer_forward.6}
  #allocation0 [shape = 'u32[]', space=smem, size = 0x4, offset = 0x4, fixed_abs, tag = 'smem constant byte address 0x4 - core index']
  #allocation1 [shape = 'u32[72,128]{1,0:T(1,128)}', space=vmem, size = 0x9000, scoped, tag = 'internal scratch']
  %s0 = inlined_call_operand.vmem [shape: bf16[4,16,8], index: 0, kind: input, shape index: {}]
  %s1 = inlined_call_operand.hbm [shape: f32[16,32], index: 1, kind: input, shape index: {}]
  %s2 = inlined_call_operand.hbm [shape: bf16[4,8,32], index: 2, kind: input, shape index: {}]
  %s3 = inlined_call_operand.vmem [shape: f32[1,32], index: 3, kind: input, shape index: {}]
  %s4 = inlined_call_operand.vmem [shape: f32[1,32], index: 4, kind: input, shape index: {}]
  %s5 = inlined_call_operand.vmem [shape: f32[1,32], index: 5, kind: input, shape index: {}]
  %s6 = inlined_call_operand.vmem [shape: f32[16,32], index: 6, kind: output, shape index: {}]
  %s7 = sld [smem:[#allocation0]]
  $region42: #{tp_decoder_layer_forward.6} parent=0
    _
  %s9 = ssub.s32 1, %s7
  %s10 = scalar_select 0, %s9, %s7
  $region1: #{tp_decoder_layer_forward.6} parent=0
    #allocation2 [shape = 'u8[8192]{0}', space=vmem, size = 0x2000, scoped, tag = 'input window, operand 1, single buffered']
    #allocation3 [shape = 's32[1]{0}', space=sflag, size = 0x4, scoped, tag = 'scoped memory for tp_decoder_layer_forward.6']
    #allocation4 [shape = 'u8[8192]{0}', space=vmem, size = 0x2000, scoped, tag = 'input window, operand 2, single buffered']
    #allocation5 [shape = 's32[1]{0}', space=sflag, size = 0x4, scoped, tag = 'scoped memory for tp_decoder_layer_forward.6']
    %11 = vsyncpa [#allocation3], 0
    %12 = vsyncpa [#allocation5], 0
    // Predicated region
    $region2: #{tp_decoder_layer_forward.6} parent=1 // pred_check
      _
    $region3: #{tp_decoder_layer_forward.6} parent=1 // pred_check_branch
      %14 = sbr.rel (0) target = $region5
    $region4: #{tp_decoder_layer_forward.6} parent=1 // pred_region
      _
    $region5: #{tp_decoder_layer_forward.6} parent=1 // pred_fallthru
      _
    // Predicated region
    $region6: #{tp_decoder_layer_forward.6} parent=1 // pred_check
      _
    $region7: #{tp_decoder_layer_forward.6} parent=1 // pred_check_branch
      %16 = sbr.rel (0) target = $region9
    $region8: #{tp_decoder_layer_forward.6} parent=1 // pred_region
      %18 = vsyncadd [#allocation3], 0
      %s19 = sshll.u32 %s1, 4
      %s20 = int_to_ptr.hbm [resolvable:$true] %s19
      %s21 = sshll.u32 [#allocation2], 4
      %s22 = int_to_ptr.vmem [resolvable:$true] %s21
      %27 = dma.hbm_to_vmem [thread:$0]  %s20, 256, %s22, [#allocation3], 128, 128, 8
    $region9: #{tp_decoder_layer_forward.6} parent=1 // pred_fallthru
      _
    // Predicated region
    $region10: #{tp_decoder_layer_forward.6} parent=1 // pred_check
      _
    $region11: #{tp_decoder_layer_forward.6} parent=1 // pred_check_branch
      %29 = sbr.rel (0) target = $region13
    $region12: #{tp_decoder_layer_forward.6} parent=1 // pred_region
      %31 = vsyncadd [#allocation5], 0
      %s32 = sshll.u32 %s2, 4
      %s33 = int_to_ptr.hbm [resolvable:$true] %s32
      %s34 = sshll.u32 [#allocation4], 4
      %s35 = int_to_ptr.vmem [resolvable:$true] %s34
      %40 = dma.hbm_to_vmem [thread:$0]  %s33, 256, %s35, [#allocation5], 64, 64, 4
    $region13: #{tp_decoder_layer_forward.6} parent=1 // pred_fallthru
      _
    // Predicated region
    $region14: #{tp_decoder_layer_forward.6} parent=1 // pred_check
      _
    $region15: #{tp_decoder_layer_forward.6} parent=1 // pred_check_branch
      %42 = sbr.rel (0) target = $region17
    $region16: #{tp_decoder_layer_forward.6} parent=1 // pred_region
      _
    $region17: #{tp_decoder_layer_forward.6} parent=1 // pred_fallthru
      _
    // Predicated region
    $region18: #{tp_decoder_layer_forward.6} parent=1 // pred_check
      _
    $region19: #{tp_decoder_layer_forward.6} parent=1 // pred_check_branch
      %44 = sbr.rel (0) target = $region21
    $region20: #{tp_decoder_layer_forward.6} parent=1 // pred_region
      _
    $region21: #{tp_decoder_layer_forward.6} parent=1 // pred_fallthru
      _
    // Predicated region
    $region22: #{tp_decoder_layer_forward.6} parent=1 // pred_check
      _
    $region23: #{tp_decoder_layer_forward.6} parent=1 // pred_check_branch
      %46 = sbr.rel (0) target = $region25
    $region24: #{tp_decoder_layer_forward.6} parent=1 // pred_region
      _
    $region25: #{tp_decoder_layer_forward.6} parent=1 // pred_fallthru
      _
    // Predicated region
    $region26: #{tp_decoder_layer_forward.6} parent=1 // pred_check
      _
    $region27: #{tp_decoder_layer_forward.6} parent=1 // pred_check_branch
      %48 = sbr.rel (0) target = $region29
    $region28: #{tp_decoder_layer_forward.6} parent=1 // pred_region
      %50 = dma.done [#allocation3], 256
    $region29: #{tp_decoder_layer_forward.6} parent=1 // pred_fallthru
      _
    // Predicated region
    $region30: #{tp_decoder_layer_forward.6} parent=1 // pred_check
      _
    $region31: #{tp_decoder_layer_forward.6} parent=1 // pred_check_branch
      %52 = sbr.rel (0) target = $region33
    $region32: #{tp_decoder_layer_forward.6} parent=1 // pred_region
      %54 = dma.done [#allocation5], 256
    $region33: #{tp_decoder_layer_forward.6} parent=1 // pred_fallthru
      _
    %v56 = vld [vmem:[%s0] sm:$0xf]
    %v57 = vld [vmem:[%s0 + $0x4] sm:$0xf]
    %v58 = vld [vmem:[#allocation4] sm:$0xf]
    %s59 = scalar_lea.vmem %s0, 8
    %v60 = vld [vmem:[%s59] sm:$0xf]
    %v61 = vld [vmem:[%s59 + $0x4] sm:$0xf]
    %s62 = scalar_lea.vmem [#allocation4], 4
    %v63 = vld [vmem:[%s62] sm:$0xf]
    %v66 = vunpack.c.l.b16 %v60
    %v67 = vunpack.c.l.b16 %v61
    %v68 = vpack.c.b16 %v67, %v66
    %vm69 = vcmask 64512
    %v71 = vsel %vm69, %v68, 0
    %vm73 = vcmask 1043456
    %v75 = vsel %vm73, %v63, 0
    %77 = vmatpush.bf16.msra.mxu0 0
    %78 = vmatpush.bf16.msra.mxu0 0
    %79 = vmatpush.bf16.msra.mxu0 0
    %80 = vmatpush.bf16.msra.mxu0 0
    %81 = vmatpush.bf16.msra.mxu0 0
    %82 = vmatpush.bf16.msra.mxu0 0
    %83 = vmatpush.bf16.msra.mxu0 0
    %84 = vmatpush.bf16.msra.mxu0 %v75
    %85 = vmatmul.bf16.gmra.mxu0 %v71
    %v86 = vpop.f32.mrf.mxu0
    %v87 = vadd.f32 0.0, %v86
    %v88 = vpop.f32.mrf.mxu0
    %v89 = vadd.f32 0.0, %v88
    %90 = vdwg.mxu0
    %v93 = vunpack.c.l.b16 %v56
    %v94 = vunpack.c.l.b16 %v57
    %v95 = vpack.c.b16 %v94, %v93
    %v97 = vsel %vm69, %v95, 0
    %v100 = vsel %vm73, %v58, 0
    %102 = vmatpush.bf16.msra.mxu0 0
    %103 = vmatpush.bf16.msra.mxu0 0
    %104 = vmatpush.bf16.msra.mxu0 0
    %105 = vmatpush.bf16.msra.mxu0 0
    %106 = vmatpush.bf16.msra.mxu0 0
    %107 = vmatpush.bf16.msra.mxu0 0
    %108 = vmatpush.bf16.msra.mxu0 0
    %109 = vmatpush.bf16.msra.mxu0 %v100
    %110 = vmatmul.bf16.gmra.mxu0 %v97
    %v111 = vpop.f32.mrf.mxu0
    %v112 = vadd.f32 %v87, %v111
    %v113 = vpop.f32.mrf.mxu0
    %v114 = vadd.f32 %v89, %v113
    %115 = vdwg.mxu0
    %s116 = scalar_lea.vmem %s0, 16
    %v117 = vld [vmem:[%s116] sm:$0xf]
    %v118 = vld [vmem:[%s116 + $0x4] sm:$0xf]
    %s119 = scalar_lea.vmem [#allocation4], 8
    %v120 = vld [vmem:[%s119] sm:$0xf]
    %v123 = vunpack.c.l.b16 %v117
    %v124 = vunpack.c.l.b16 %v118
    %v125 = vpack.c.b16 %v124, %v123
    %v127 = vsel %vm69, %v125, 0
    %v130 = vsel %vm73, %v120, 0
    %132 = vmatpush.bf16.msra.mxu0 0
    %133 = vmatpush.bf16.msra.mxu0 0
    %134 = vmatpush.bf16.msra.mxu0 0
    %135 = vmatpush.bf16.msra.mxu0 0
    %136 = vmatpush.bf16.msra.mxu0 0
    %137 = vmatpush.bf16.msra.mxu0 0
    %138 = vmatpush.bf16.msra.mxu0 0
    %139 = vmatpush.bf16.msra.mxu0 %v130
    %140 = vmatmul.bf16.gmra.mxu0 %v127
    %v141 = vpop.f32.mrf.mxu0
    %v142 = vadd.f32 0.0, %v141
    %v143 = vpop.f32.mrf.mxu0
    %v144 = vadd.f32 0.0, %v143
    %145 = vdwg.mxu0
    %v146 = vadd.f32 %v112, %v142
    %v147 = vadd.f32 %v114, %v144
    %s148 = scalar_lea.vmem %s0, 24
    %v149 = vld [vmem:[%s148] sm:$0xf]
    %v150 = vld [vmem:[%s148 + $0x4] sm:$0xf]
    %s151 = scalar_lea.vmem [#allocation4], 12
    %v152 = vld [vmem:[%s151] sm:$0xf]
    %v155 = vunpack.c.l.b16 %v149
    %v156 = vunpack.c.l.b16 %v150
    %v157 = vpack.c.b16 %v156, %v155
    %v159 = vsel %vm69, %v157, 0
    %v162 = vsel %vm73, %v152, 0
    %164 = vmatpush.bf16.msra.mxu0 0
    %165 = vmatpush.bf16.msra.mxu0 0
    %166 = vmatpush.bf16.msra.mxu0 0
    %167 = vmatpush.bf16.msra.mxu0 0
    %168 = vmatpush.bf16.msra.mxu0 0
    %169 = vmatpush.bf16.msra.mxu0 0
    %170 = vmatpush.bf16.msra.mxu0 0
    %171 = vmatpush.bf16.msra.mxu0 %v162
    %172 = vmatmul.bf16.gmra.mxu0 %v159
    %v173 = vpop.f32.mrf.mxu0
    %v174 = vadd.f32 0.0, %v173
    %v175 = vpop.f32.mrf.mxu0
    %v176 = vadd.f32 0.0, %v175
    %177 = vdwg.mxu0
    %v178 = vadd.f32 %v146, %v174
    %v179 = vadd.f32 %v147, %v176
    %v180 = vld [vmem:[%s3] sm:$0x1]
    %v182 = vperm.slane %v180, 0
    %v184 = vadd.f32 %v178, %v182
    %v185 = vadd.f32 %v179, %v182
    %v186 = vld [vmem:[#allocation2] sm:$0xff]
    %v187 = vld [vmem:[#allocation2 + $0x8] sm:$0xff]
    %v188 = vadd.f32 %v184, %v186
    %v189 = vadd.f32 %v185, %v187
    %vm190 = vcmask 261120
    %v191 = vsel %vm190, %v188, 0.0
    %192 = vadd.xlane.f32.xlu0 %v191
    %v193 = vpop.xlane.xlu0 %192
    %v194 = vsel %vm190, %v189, 0.0
    %195 = vadd.xlane.f32.xlu0 %v194
    %v196 = vpop.xlane.xlu0 %195
    %v197 = vmul.f32 %v193, 0.03125
    %v198 = vmul.f32 %v196, 0.03125
    %v199 = vmul.f32 %v188, %v188
    %v200 = vmul.f32 %v189, %v189
    %v201 = vsel %vm190, %v199, 0.0
    %202 = vadd.xlane.f32.xlu0 %v201
    %v203 = vpop.xlane.xlu0 %202
    %v204 = vsel %vm190, %v200, 0.0
    %205 = vadd.xlane.f32.xlu0 %v204
    %v206 = vpop.xlane.xlu0 %205
    %v207 = vmul.f32 %v203, 0.03125
    %v208 = vmul.f32 %v206, 0.03125
    %v209 = vmul.f32 %v197, %v197
    %v210 = vmul.f32 %v198, %v198
    %v211 = vsub.f32 %v207, %v209
    %v212 = vsub.f32 %v208, %v210
    %v213 = vmax.f32 %v211, 0.0
    %v214 = vmax.f32 %v212, 0.0
    %v215 = vsub.f32 %v188, %v197
    %v216 = vsub.f32 %v189, %v198
    %v217 = vadd.f32 %v213, 1e-05
    %v218 = vadd.f32 %v214, 1e-05
    %v219 = vrsqrt.pop %v217
    %v220 = vmul.f32 %v219, %v217
    %v221 = vmul.f32 %v220, %v219
    %v222 = vmul.f32 0.5, %v221
    %v223 = vsub.f32 1.5, %v222
    %v224 = vmul.f32 %v219, %v223
    %vm225 = vweird.f32 %v217
    %vm226 = vweird.f32 %v219
    %vm227 = vmor %vm225, %vm226
    %v228 = vsel %vm227, %v219, %v224
    %v229 = vrsqrt.pop %v218
    %v230 = vmul.f32 %v229, %v218
    %v231 = vmul.f32 %v230, %v229
    %v232 = vmul.f32 0.5, %v231
    %v233 = vsub.f32 1.5, %v232
    %v234 = vmul.f32 %v229, %v233
    %vm235 = vweird.f32 %v218
    %vm236 = vweird.f32 %v229
    %vm237 = vmor %vm235, %vm236
    %v238 = vsel %vm237, %v229, %v234
    %v239 = vmul.f32 %v215, %v228
    %v240 = vmul.f32 %v216, %v238
    %v241 = vld [vmem:[%s4] sm:$0x1]
    %v243 = vperm.slane %v241, 0
    %v245 = vmul.f32 %v239, %v243
    %v246 = vmul.f32 %v240, %v243
    %v247 = vld [vmem:[%s5] sm:$0x1]
    %v249 = vperm.slane %v247, 0
    %v251 = vadd.f32 %v245, %v249
    %v252 = vadd.f32 %v246, %v249
    %253 = vst.msk [vmem:[%s6] sm:$0xff] %vm190, %v251
    %254 = vst.msk [vmem:[%s6 + $0x8] sm:$0xff] %vm190, %v252
    // Predicated region
    $region34: #{tp_decoder_layer_forward.6} parent=1 // pred_check
      _
    $region35: #{tp_decoder_layer_forward.6} parent=1 // pred_check_branch
      %256 = sbr.rel (0) target = $region37
    $region36: #{tp_decoder_layer_forward.6} parent=1 // pred_region
      _
    $region37: #{tp_decoder_layer_forward.6} parent=1 // pred_fallthru
      _
    // Predicated region
    $region38: #{tp_decoder_layer_forward.6} parent=1 // pred_check
      _
    $region39: #{tp_decoder_layer_forward.6} parent=1 // pred_check_branch
      %258 = sbr.rel (0) target = $region41
    $region40: #{tp_decoder_layer_forward.6} parent=1 // pred_region
      _
    $region41: #{tp_decoder_layer_forward.6} parent=1 // pred_fallthru
      _
    %259 = vsyncpa [#allocation3], 1
    %260 = vsyncpa [#allocation5], 1

// kernel: tp_decoder_layer_forward.5
$region0: #{tp_decoder_layer_forward.5}
  #allocation0 [shape = 'u32[]', space=smem, size = 0x4, offset = 0x4, fixed_abs, tag = 'smem constant byte address 0x4 - core index']
  #allocation1 [shape = 'u32[72,128]{1,0:T(1,128)}', space=vmem, size = 0x9000, scoped, tag = 'internal scratch']
  #allocation2 [shape = 'f32[8,1]{1,0:T(8,128)}', space=vmem, size = 0x1000, scoped, tag = 'scratch operand']
  #allocation3 [shape = 'f32[8,1]{1,0:T(8,128)}', space=vmem, size = 0x1000, scoped, tag = 'scratch operand']
  #allocation4 [shape = 'f32[8,8]{1,0:T(8,128)}', space=vmem, size = 0x1000, scoped, tag = 'scratch operand']
  %s0 = inlined_call_operand.vmem [shape: bf16[4,16,8], index: 0, kind: input, shape index: {}]
  %s1 = inlined_call_operand.vmem [shape: bf16[4,16,8], index: 1, kind: input, shape index: {}]
  %s2 = inlined_call_operand.vmem [shape: bf16[4,16,8], index: 2, kind: input, shape index: {}]
  %s3 = inlined_call_operand.vmem [shape: bf16[4,16,8], index: 3, kind: input, shape index: {}]
  %s4 = inlined_call_operand.vmem [shape: f32[8,8], index: 4, kind: input, shape index: {}]
  %s5 = inlined_call_operand.vmem [shape: bf16[4,16,8], index: 5, kind: output, shape index: {}]
  %s6 = sld [smem:[#allocation0]]
  $region61: #{tp_decoder_layer_forward.5} parent=0
    _
  %s8 = ssub.s32 1, %s6
  %s9 = scalar_select 0, %s8, %s6
  loop: start=0, step=1, limit=10
  $region2: #{tp_decoder_layer_forward.5} parent=0 // loop_pre_header
    _
  $region3: #{tp_decoder_layer_forward.5} parent=0 // loop_header
    %s11 = sphi 0, %s15
    %p12 = scmp.ge.s32.totalorder %s11, 10
    %s18 = sphi 0, %s44
    %s19 = sphi 0, %s40
    %s20 = sphi 0, %s36
    %s21 = sphi 0, %s32
    %s22 = sphi 0, %s18
    %s23 = sphi 0, %s19
    %s24 = sphi 0, %s20
    %s25 = sphi 0, %s21
    %s26 = sphi 0, %s22
    %s27 = sphi 0, %s23
    %s28 = sphi 0, %s24
    %s29 = sphi 0, %s25
    %s51 = sphi 0, %s53
    %s54 = sphi 0, %s51
    %s55 = sphi 0, %s54
    %s71 = sphi 0, %s55
    %s81 = sphi 0, %s83
    %s84 = sphi 0, %s81
    %s85 = sphi 0, %s84
    %s101 = sphi 0, %s85
    %s111 = sphi 0, %s113
    %s114 = sphi 0, %s111
    %s115 = sphi 0, %s114
    %s131 = sphi 0, %s115
    %s141 = sphi 0, %s143
    %s144 = sphi 0, %s141
    %s145 = sphi 0, %s144
    %s161 = sphi 0, %s145
    %s169 = sphi 0, %s171
    %s172 = sphi 0, %s169
    %s173 = sphi 0, %s172
    %s189 = sphi 0, %s173
    %s199 = sphi 0, %s201
    %s202 = sphi 0, %s199
    %s203 = sphi 0, %s202
    %s219 = sphi 0, %s203
  $region4: #{tp_decoder_layer_forward.5} parent=0 // loop_header_branch
    %14 = sbr.rel (%p12) target = $region8
  $region5: #{tp_decoder_layer_forward.5} parent=0 // loop_body
    %s16 = ssub.s32 %s11, 1
    %s17 = ssub.s32 %s11, 2
    %s30 = sadd.s32 1, %s21
    %p31 = scmp.ge.s32.totalorder %s30, 1
    %s32 = scalar_select %p31, 0, %s30
    %s33 = sadd.s32 1, %s20
    %s34 = scalar_select %p31, %s33, %s20
    %p35 = scmp.ge.s32.totalorder %s34, 1
    %s36 = scalar_select %p35, 0, %s34
    %s37 = sadd.s32 1, %s19
    %s38 = scalar_select %p35, %s37, %s19
    %p39 = scmp.ge.s32.totalorder %s38, 4
    %s40 = scalar_select %p39, 0, %s38
    %s41 = sadd.s32 1, %s18
    %s42 = scalar_select %p39, %s41, %s18
    %p43 = scmp.ge.s32.totalorder %s42, 2
    %s44 = scalar_select %p43, 0, %s42
    %s45 = sadd.s32 %s18, %s20
    %s46 = sadd.s32 %s44, %s36
    %s47 = ssub.s32 %s19, %s40
    %s48 = ssub.s32 %s45, %s46
    %s49 = sor.u32 %s47, %s48
    %p50 = scmp.eq.s32.totalorder %s49, 0
    %s52 = sadd.s32 %s51, 1
    %s53 = scalar_select %p50, %s51, %s52
    %p56 = pneg %p50
    %p57 = scmp.eq.s32.totalorder %s11, 7
    %p58 = por %p56, %p57
    %p59 = scmp.ne.s32.totalorder %s51, %s54
    %p60 = scmp.eq.s32.totalorder %s11, 0
    %p61 = por %p59, %p60
    %p62 = scmp.ne.s32.totalorder %s51, %s54
    %p63 = scmp.eq.s32.totalorder %s16, 7
    %p64 = por %p62, %p63
    %p65 = scmp.ne.s32.totalorder %s54, %s55
    %p66 = scmp.eq.s32.totalorder %s16, 0
    %p67 = por %p65, %p66
    %p68 = scmp.ne.s32.totalorder %s54, %s55
    %p69 = scmp.eq.s32.totalorder %s17, 7
    %p70 = por %p68, %p69
    %p72 = scmp.ne.s32.totalorder %s55, %s71
    %p73 = scmp.eq.s32.totalorder %s17, 0
    %p74 = por %p72, %p73
    %s75 = sadd.s32 %s18, %s21
    %s76 = sadd.s32 %s44, %s32
    %s77 = ssub.s32 %s19, %s40
    %s78 = ssub.s32 %s75, %s76
    %s79 = sor.u32 %s77, %s78
    %p80 = scmp.eq.s32.totalorder %s79, 0
    %s82 = sadd.s32 %s81, 1
    %s83 = scalar_select %p80, %s81, %s82
    %p86 = pneg %p80
    %p87 = scmp.eq.s32.totalorder %s11, 7
    %p88 = por %p86, %p87
    %p89 = scmp.ne.s32.totalorder %s81, %s84
    %p90 = scmp.eq.s32.totalorder %s11, 0
    %p91 = por %p89, %p90
    %p92 = scmp.ne.s32.totalorder %s81, %s84
    %p93 = scmp.eq.s32.totalorder %s16, 7
    %p94 = por %p92, %p93
    %p95 = scmp.ne.s32.totalorder %s84, %s85
    %p96 = scmp.eq.s32.totalorder %s16, 0
    %p97 = por %p95, %p96
    %p98 = scmp.ne.s32.totalorder %s84, %s85
    %p99 = scmp.eq.s32.totalorder %s17, 7
    %p100 = por %p98, %p99
    %p102 = scmp.ne.s32.totalorder %s85, %s101
    %p103 = scmp.eq.s32.totalorder %s17, 0
    %p104 = por %p102, %p103
    %s105 = sadd.s32 %s18, %s21
    %s106 = sadd.s32 %s44, %s32
    %s107 = ssub.s32 %s19, %s40
    %s108 = ssub.s32 %s105, %s106
    %s109 = sor.u32 %s107, %s108
    %p110 = scmp.eq.s32.totalorder %s109, 0
    %s112 = sadd.s32 %s111, 1
    %s113 = scalar_select %p110, %s111, %s112
    %p116 = pneg %p110
    %p117 = scmp.eq.s32.totalorder %s11, 7
    %p118 = por %p116, %p117
    %p119 = scmp.ne.s32.totalorder %s111, %s114
    %p120 = scmp.eq.s32.totalorder %s11, 0
    %p121 = por %p119, %p120
    %p122 = scmp.ne.s32.totalorder %s111, %s114
    %p123 = scmp.eq.s32.totalorder %s16, 7
    %p124 = por %p122, %p123
    %p125 = scmp.ne.s32.totalorder %s114, %s115
    %p126 = scmp.eq.s32.totalorder %s16, 0
    %p127 = por %p125, %p126
    %p128 = scmp.ne.s32.totalorder %s114, %s115
    %p129 = scmp.eq.s32.totalorder %s17, 7
    %p130 = por %p128, %p129
    %p132 = scmp.ne.s32.totalorder %s115, %s131
    %p133 = scmp.eq.s32.totalorder %s17, 0
    %p134 = por %p132, %p133
    %s135 = sadd.s32 %s18, %s20
    %s136 = sadd.s32 %s44, %s36
    %s137 = ssub.s32 %s19, %s40
    %s138 = ssub.s32 %s135, %s136
    %s139 = sor.u32 %s137, %s138
    %p140 = scmp.eq.s32.totalorder %s139, 0
    %s142 = sadd.s32 %s141, 1
    %s143 = scalar_select %p140, %s141, %s142
    %p146 = pneg %p140
    %p147 = scmp.eq.s32.totalorder %s11, 7
    %p148 = por %p146, %p147
    %p149 = scmp.ne.s32.totalorder %s141, %s144
    %p150 = scmp.eq.s32.totalorder %s11, 0
    %p151 = por %p149, %p150
    %p152 = scmp.ne.s32.totalorder %s141, %s144
    %p153 = scmp.eq.s32.totalorder %s16, 7
    %p154 = por %p152, %p153
    %p155 = scmp.ne.s32.totalorder %s144, %s145
    %p156 = scmp.eq.s32.totalorder %s16, 0
    %p157 = por %p155, %p156
    %p158 = scmp.ne.s32.totalorder %s144, %s145
    %p159 = scmp.eq.s32.totalorder %s17, 7
    %p160 = por %p158, %p159
    %p162 = scmp.ne.s32.totalorder %s145, %s161
    %p163 = scmp.eq.s32.totalorder %s17, 0
    %p164 = por %p162, %p163
    %s165 = ssub.s32 %s20, %s36
    %s166 = ssub.s32 %s21, %s32
    %s167 = sor.u32 %s165, %s166
    %p168 = scmp.eq.s32.totalorder %s167, 0
    %s170 = sadd.s32 %s169, 1
    %s171 = scalar_select %p168, %s169, %s170
    %p174 = pneg %p168
    %p175 = scmp.eq.s32.totalorder %s11, 7
    %p176 = por %p174, %p175
    %p177 = scmp.ne.s32.totalorder %s169, %s172
    %p178 = scmp.eq.s32.totalorder %s11, 0
    %p179 = por %p177, %p178
    %p180 = scmp.ne.s32.totalorder %s169, %s172
    %p181 = scmp.eq.s32.totalorder %s16, 7
    %p182 = por %p180, %p181
    %p183 = scmp.ne.s32.totalorder %s172, %s173
    %p184 = scmp.eq.s32.totalorder %s16, 0
    %p185 = por %p183, %p184
    %p186 = scmp.ne.s32.totalorder %s172, %s173
    %p187 = scmp.eq.s32.totalorder %s17, 7
    %p188 = por %p186, %p187
    %p190 = scmp.ne.s32.totalorder %s173, %s189
    %p191 = scmp.eq.s32.totalorder %s17, 0
    %p192 = por %p190, %p191
    %s193 = sadd.s32 %s18, %s20
    %s194 = sadd.s32 %s44, %s36
    %s195 = ssub.s32 %s19, %s40
    %s196 = ssub.s32 %s193, %s194
    %s197 = sor.u32 %s195, %s196
    %p198 = scmp.eq.s32.totalorder %s197, 0
    %s200 = sadd.s32 %s199, 1
    %s201 = scalar_select %p198, %s199, %s200
    %p204 = pneg %p198
    %p205 = scmp.eq.s32.totalorder %s11, 7
    %p206 = por %p204, %p205
    %p207 = scmp.ne.s32.totalorder %s199, %s202
    %p208 = scmp.eq.s32.totalorder %s11, 0
    %p209 = por %p207, %p208
    %p210 = scmp.ne.s32.totalorder %s199, %s202
    %p211 = scmp.eq.s32.totalorder %s16, 7
    %p212 = por %p210, %p211
    %p213 = scmp.ne.s32.totalorder %s202, %s203
    %p214 = scmp.eq.s32.totalorder %s16, 0
    %p215 = por %p213, %p214
    %p216 = scmp.ne.s32.totalorder %s202, %s203
    %p217 = scmp.eq.s32.totalorder %s17, 7
    %p218 = por %p216, %p217
    %p220 = scmp.ne.s32.totalorder %s203, %s219
    %p221 = scmp.eq.s32.totalorder %s17, 0
    %p222 = por %p220, %p221
    %p223 = scmp.le.s32.totalorder 1, %s11
    %p224 = scmp.lt.s32.totalorder %s11, 9
    %p225 = pnand %p223, %p224
    %p226 = pneg %p225
    // Predicated region
    $region9: #{tp_decoder_layer_forward.5} parent=5 // pred_check
      _
    $region10: #{tp_decoder_layer_forward.5} parent=5 // pred_check_branch
      %228 = sbr.rel (%p225) target = $region12
    $region11: #{tp_decoder_layer_forward.5} parent=5 // pred_region
      %s229 = ssub.s32 %s11, 1
      // Predicated region
      $region13: #{tp_decoder_layer_forward.5} parent=11 // pred_check
        %p230 = pneg %p185
      $region14: #{tp_decoder_layer_forward.5} parent=11 // pred_check_branch
        %232 = sbr.rel (%p230) target = $region16
      $region15: #{tp_decoder_layer_forward.5} parent=11 // pred_region
        %p233 = scmp.lt.s32.totalorder %s24, 0
        %s234 = scalar_select %p233, %s24, 0
        %p235 = scmp.lt.s32.totalorder %s25, 0
        %s236 = scalar_select %p235, %s25, 0
        %s237 = sadd.s32 %s236, %s234
        %s238 = smul.addr %s237, 8
        %s239 = scalar_lea.vmem %s4, %s238
      $region16: #{tp_decoder_layer_forward.5} parent=11 // pred_fallthru
        _
    $region12: #{tp_decoder_layer_forward.5} parent=5 // pred_fallthru
      _
    %p240 = scmp.lt.s32.totalorder %s11, 8
    // Predicated region
    $region17: #{tp_decoder_layer_forward.5} parent=5 // pred_check
      %p241 = pneg %p240
    $region18: #{tp_decoder_layer_forward.5} parent=5 // pred_check_branch
      %243 = sbr.rel (%p241) target = $region20
    $region19: #{tp_decoder_layer_forward.5} parent=5 // pred_region
      // Predicated region
      $region21: #{tp_decoder_layer_forward.5} parent=19 // pred_check
        %p244 = pneg %p61
      $region22: #{tp_decoder_layer_forward.5} parent=19 // pred_check_branch
        %246 = sbr.rel (%p244) target = $region24
      $region23: #{tp_decoder_layer_forward.5} parent=19 // pred_region
        %s247 = sadd.s32 %s18, %s20
        %p248 = scmp.lt.s32.totalorder %s19, 3
        %s249 = scalar_select %p248, %s19, 3
        %p250 = scmp.lt.s32.totalorder %s247, 1
        %s251 = scalar_select %p250, %s247, 1
        %s252 = smul.addr %s249, 2
        %s253 = sadd.s32 %s251, %s252
        %s254 = smul.addr %s253, 4
        %s255 = scalar_lea.vmem %s0, %s254
        %s256 = sadd.s32 %s18, %s20
      $region24: #{tp_decoder_layer_forward.5} parent=19 // pred_fallthru
        _
      // Predicated region
      $region25: #{tp_decoder_layer_forward.5} parent=19 // pred_check
        %p257 = pneg %p91
      $region26: #{tp_decoder_layer_forward.5} parent=19 // pred_check_branch
        %259 = sbr.rel (%p257) target = $region28
      $region27: #{tp_decoder_layer_forward.5} parent=19 // pred_region
        %s260 = sadd.s32 %s18, %s21
        %p261 = scmp.lt.s32.totalorder %s19, 3
        %s262 = scalar_select %p261, %s19, 3
        %p263 = scmp.lt.s32.totalorder %s260, 1
        %s264 = scalar_select %p263, %s260, 1
        %s265 = smul.addr %s262, 2
        %s266 = sadd.s32 %s264, %s265
        %s267 = smul.addr %s266, 4
        %s268 = scalar_lea.vmem %s1, %s267
        %s269 = sadd.s32 %s18, %s21
      $region28: #{tp_decoder_layer_forward.5} parent=19 // pred_fallthru
        _
      // Predicated region
      $region29: #{tp_decoder_layer_forward.5} parent=19 // pred_check
        %p270 = pneg %p121
      $region30: #{tp_decoder_layer_forward.5} parent=19 // pred_check_branch
        %272 = sbr.rel (%p270) target = $region32
      $region31: #{tp_decoder_layer_forward.5} parent=19 // pred_region
        %s273 = sadd.s32 %s18, %s21
        %p274 = scmp.lt.s32.totalorder %s19, 3
        %s275 = scalar_select %p274, %s19, 3
        %p276 = scmp.lt.s32.totalorder %s273, 1
        %s277 = scalar_select %p276, %s273, 1
        %s278 = smul.addr %s275, 2
        %s279 = sadd.s32 %s277, %s278
        %s280 = smul.addr %s279, 4
        %s281 = scalar_lea.vmem %s2, %s280
        %s282 = sadd.s32 %s18, %s21
      $region32: #{tp_decoder_layer_forward.5} parent=19 // pred_fallthru
        _
      // Predicated region
      $region33: #{tp_decoder_layer_forward.5} parent=19 // pred_check
        %p283 = pneg %p151
      $region34: #{tp_decoder_layer_forward.5} parent=19 // pred_check_branch
        %285 = sbr.rel (%p283) target = $region36
      $region35: #{tp_decoder_layer_forward.5} parent=19 // pred_region
        %s286 = sadd.s32 %s18, %s20
        %p287 = scmp.lt.s32.totalorder %s19, 3
        %s288 = scalar_select %p287, %s19, 3
        %p289 = scmp.lt.s32.totalorder %s286, 1
        %s290 = scalar_select %p289, %s286, 1
        %s291 = smul.addr %s288, 2
        %s292 = sadd.s32 %s290, %s291
        %s293 = smul.addr %s292, 4
        %s294 = scalar_lea.vmem %s3, %s293
        %s295 = sadd.s32 %s18, %s20
      $region36: #{tp_decoder_layer_forward.5} parent=19 // pred_fallthru
        _
    $region20: #{tp_decoder_layer_forward.5} parent=5 // pred_fallthru
      _
    %p296 = scmp.le.s32.totalorder 1, %s11
    %p297 = scmp.lt.s32.totalorder %s11, 9
    %p298 = pnand %p296, %p297
    %p299 = pneg %p298
    // Predicated region
    $region37: #{tp_decoder_layer_forward.5} parent=5 // pred_check
      _
    $region38: #{tp_decoder_layer_forward.5} parent=5 // pred_check_branch
      %301 = sbr.rel (%p298) target = $region40
    $region39: #{tp_decoder_layer_forward.5} parent=5 // pred_region
      %s302 = ssub.s32 %s11, 1
      %s303 = sadd.s32 %s22, %s24
      %p304 = scmp.lt.s32.totalorder %s23, 3
      %s305 = scalar_select %p304, %s23, 3
      %p306 = scmp.lt.s32.totalorder %s303, 1
      %s307 = scalar_select %p306, %s303, 1
      %s308 = smul.addr %s305, 2
      %s309 = sadd.s32 %s307, %s308
      %s310 = smul.addr %s309, 4
      %s311 = scalar_lea.vmem %s0, %s310
      %p312 = pneg %p67
      %p313 = pneg %p64
      %s314 = sadd.s32 %s22, %s25
      %p315 = scmp.lt.s32.totalorder %s23, 3
      %s316 = scalar_select %p315, %s23, 3
      %p317 = scmp.lt.s32.totalorder %s314, 1
      %s318 = scalar_select %p317, %s314, 1
      %s319 = smul.addr %s316, 2
      %s320 = sadd.s32 %s318, %s319
      %s321 = smul.addr %s320, 4
      %s322 = scalar_lea.vmem %s1, %s321
      %p323 = pneg %p97
      %p324 = pneg %p94
      %s325 = sadd.s32 %s22, %s25
      %p326 = scmp.lt.s32.totalorder %s23, 3
      %s327 = scalar_select %p326, %s23, 3
      %p328 = scmp.lt.s32.totalorder %s325, 1
      %s329 = scalar_select %p328, %s325, 1
      %s330 = smul.addr %s327, 2
      %s331 = sadd.s32 %s329, %s330
      %s332 = smul.addr %s331, 4
      %s333 = scalar_lea.vmem %s2, %s332
      %p334 = pneg %p127
      %p335 = pneg %p124
      %s336 = sadd.s32 %s22, %s24
      %p337 = scmp.lt.s32.totalorder %s23, 3
      %s338 = scalar_select %p337, %s23, 3
      %p339 = scmp.lt.s32.totalorder %s336, 1
      %s340 = scalar_select %p339, %s336, 1
      %s341 = smul.addr %s338, 2
      %s342 = sadd.s32 %s340, %s341
      %s343 = smul.addr %s342, 4
      %s344 = scalar_lea.vmem %s3, %s343
      %p345 = pneg %p157
      %p346 = pneg %p154
      %p347 = scmp.lt.s32.totalorder %s24, 0
      %s348 = scalar_select %p347, %s24, 0
      %p349 = scmp.lt.s32.totalorder %s25, 0
      %s350 = scalar_select %p349, %s25, 0
      %s351 = sadd.s32 %s350, %s348
      %s352 = smul.addr %s351, 8
      %s353 = scalar_lea.vmem %s4, %s352
      %p354 = pneg %p185
      %p355 = pneg %p182
      %p356 = pneg %p215
      %p357 = pneg %p212
      %s358 = sadd.s32 %s22, %s24
      %p359 = scmp.lt.s32.totalorder %s23, 3
      %s360 = scalar_select %p359, %s23, 3
      %p361 = scmp.lt.s32.totalorder %s358, 1
      %s362 = scalar_select %p361, %s358, 1
      %s363 = smul.addr %s360, 2
      %s364 = sadd.s32 %s362, %s363
      %s365 = smul.addr %s364, 4
      %s366 = scalar_lea.vmem %s5, %s365
      %s367 = sadd.s32 %s22, %s24
      %p368 = scmp.lt.s32.totalorder %s23, 3
      %s369 = scalar_select %p368, %s23, 3
      %p370 = scmp.lt.s32.totalorder %s367, 1
      %s371 = scalar_select %p370, %s367, 1
      %s372 = smul.addr %s369, 2
      %s373 = sadd.s32 %s371, %s372
      %s374 = smul.addr %s373, 4
      %s375 = scalar_lea.vmem %s0, %s374
      %s376 = sadd.s32 %s22, %s24
      %s377 = sadd.s32 %s22, %s25
      %p378 = scmp.lt.s32.totalorder %s23, 3
      %s379 = scalar_select %p378, %s23, 3
      %p380 = scmp.lt.s32.totalorder %s377, 1
      %s381 = scalar_select %p380, %s377, 1
      %s382 = smul.addr %s379, 2
      %s383 = sadd.s32 %s381, %s382
      %s384 = smul.addr %s383, 4
      %s385 = scalar_lea.vmem %s1, %s384
      %s386 = sadd.s32 %s22, %s25
      %s387 = sadd.s32 %s22, %s25
      %p388 = scmp.lt.s32.totalorder %s23, 3
      %s389 = scalar_select %p388, %s23, 3
      %p390 = scmp.lt.s32.totalorder %s387, 1
      %s391 = scalar_select %p390, %s387, 1
      %s392 = smul.addr %s389, 2
      %s393 = sadd.s32 %s391, %s392
      %s394 = smul.addr %s393, 4
      %s395 = scalar_lea.vmem %s2, %s394
      %s396 = sadd.s32 %s22, %s25
      %s397 = sadd.s32 %s22, %s24
      %p398 = scmp.lt.s32.totalorder %s23, 3
      %s399 = scalar_select %p398, %s23, 3
      %p400 = scmp.lt.s32.totalorder %s397, 1
      %s401 = scalar_select %p400, %s397, 1
      %s402 = smul.addr %s399, 2
      %s403 = sadd.s32 %s401, %s402
      %s404 = smul.addr %s403, 4
      %s405 = scalar_lea.vmem %s3, %s404
      %s406 = sadd.s32 %s22, %s24
      %p407 = scmp.lt.s32.totalorder %s24, 0
      %s408 = scalar_select %p407, %s24, 0
      %p409 = scmp.lt.s32.totalorder %s25, 0
      %s410 = scalar_select %p409, %s25, 0
      %s411 = sadd.s32 %s410, %s408
      %s412 = smul.addr %s411, 8
      %s413 = scalar_lea.vmem %s4, %s412
      %s414 = sadd.s32 %s22, %s24
      %p415 = scmp.lt.s32.totalorder %s23, 3
      %s416 = scalar_select %p415, %s23, 3
      %p417 = scmp.lt.s32.totalorder %s414, 1
      %s418 = scalar_select %p417, %s414, 1
      %s419 = smul.addr %s416, 2
      %s420 = sadd.s32 %s418, %s419
      %s421 = smul.addr %s420, 4
      %s422 = scalar_lea.vmem %s5, %s421
      %s423 = sadd.s32 %s22, %s24
      %p425 = scmp.eq.s32.totalorder %s25, 0
      // Predicated region
      $region41: #{tp_decoder_layer_forward.5} parent=39 // pred_check
        %p426 = pneg %p425
      $region42: #{tp_decoder_layer_forward.5} parent=39 // pred_check_branch
        %428 = sbr.rel (%p426) target = $region44
      $region43: #{tp_decoder_layer_forward.5} parent=39 // pred_region
        %vm429 = vcmask 7168
        %430 = vst.msk [vmem:[#allocation2] sm:$0xff] %vm429, -1e+30
        %431 = vst.msk [vmem:[#allocation3] sm:$0xff] %vm429, 0.0
        %vm432 = vcmask 64512
        %433 = vst.msk [vmem:[#allocation4] sm:$0xff] %vm432, 0.0
      $region44: #{tp_decoder_layer_forward.5} parent=39 // pred_fallthru
        _
      %v434 = vld [vmem:[%s375] sm:$0xf]
      %v435 = vld [vmem:[%s385] sm:$0xf]
      %v436 = vld [vmem:[%s413] sm:$0xff]
      %vm437 = vcmask 64512
      %v439 = vsel %vm437, %v434, 0
      %v442 = vsel %vm437, %v435, 0
      %444 = vmatpush.bf16.xpose.msra.mxu0 0
      %445 = vmatpush.bf16.xpose.msra.mxu0 0
      %446 = vmatpush.bf16.xpose.msra.mxu0 0
      %447 = vmatpush.bf16.xpose.msra.mxu0 0
      %448 = vmatpush.bf16.xpose.msra.mxu0 0
      %449 = vmatpush.bf16.xpose.msra.mxu0 0
      %450 = vmatpush.bf16.xpose.msra.mxu0 0
      %451 = vmatpush.bf16.xpose.msra.mxu0 %v442
      %452 = vmatmul.bf16.gmra.mxu0 %v439
      %v453 = vpop.f32.mrf.mxu0
      %v454 = vadd.f32 %v436, %v453
      %v455 = vpop.f32.mrf.mxu0
      %456 = vdwg.mxu0
      %v457 = vld [vmem:[#allocation2] sm:$0xff]
      %v458 = vsel %vm437, %v454, -inf
      %459 = vmax.xlane.f32.xlu0 %v458
      %v460 = vpop.xlane.xlu0 %459
      %v461 = vmax.f32 %v457, %v460
      %v462 = vsub.f32 %v457, %v461
      %v463 = vmul.f32 %v462, 1.442695
      %v464 = vpow.pop %v463
      %466 = vset.pattern.permute.xlu0 0
      %467 = vperm.xlu0 %466, %v461
      %v468 = vpop.permute.xlu0 %467
      %v470 = vsub.f32 %v454, %v468
      %v471 = vmul.f32 %v470, 1.442695
      %v472 = vpow.pop %v471
      %v473 = vld [vmem:[#allocation3] sm:$0xff]
      %v474 = vmul.f32 %v464, %v473
      %v475 = vsel %vm437, %v472, 0.0
      %476 = vadd.xlane.f32.xlu0 %v475
      %v477 = vpop.xlane.xlu0 %476
      %v478 = vadd.f32 %v474, %v477
      %vm479 = vcmask 7168
      %480 = vst.msk [vmem:[#allocation3] sm:$0xff] %vm479, %v478
      %v481 = vld [vmem:[#allocation4] sm:$0xff]
      %483 = vset.pattern.permute.xlu0 0
      %484 = vperm.xlu0 %483, %v464
      %v485 = vpop.permute.xlu0 %484
      %v487 = vmul.f32 %v485, %v481
      %v488 = vpack.c.bf16 %v472, %v472
      %v489 = vld [vmem:[%s395] sm:$0xf]
      %v491 = vsel %vm437, %v488, 0
      %vm493 = vcmask 1043456
      %v495 = vsel %vm493, %v489, 0
      %497 = vmatpush.bf16.msra.mxu0 0
      %498 = vmatpush.bf16.msra.mxu0 0
      %499 = vmatpush.bf16.msra.mxu0 0
      %500 = vmatpush.bf16.msra.mxu0 0
      %501 = vmatpush.bf16.msra.mxu0 0
      %502 = vmatpush.bf16.msra.mxu0 0
      %503 = vmatpush.bf16.msra.mxu0 0
      %504 = vmatpush.bf16.msra.mxu0 %v495
      %505 = vmatmul.bf16.gmra.mxu0 %v491
      %v506 = vpop.f32.mrf.mxu0
      %v507 = vadd.f32 0.0, %v506
      %v508 = vpop.f32.mrf.mxu0
      %509 = vdwg.mxu0
      %v510 = vadd.f32 %v487, %v507
      %511 = vst.msk [vmem:[#allocation4] sm:$0xff] %vm437, %v510
      %512 = vst.msk [vmem:[#allocation2] sm:$0xff] %vm479, %v461
      // Predicated region
      $region45: #{tp_decoder_layer_forward.5} parent=39 // pred_check
        %p513 = pneg %p425
      $region46: #{tp_decoder_layer_forward.5} parent=39 // pred_check_branch
        %515 = sbr.rel (%p513) target = $region48
      $region47: #{tp_decoder_layer_forward.5} parent=39 // pred_region
        %v516 = vld [vmem:[#allocation3] sm:$0xff]
        %v517 = vrcp.pop %v516
        %v518 = vld [vmem:[#allocation4] sm:$0xff]
        %520 = vset.pattern.permute.xlu0 0
        %521 = vperm.xlu0 %520, %v517
        %v522 = vpop.permute.xlu0 %521
        %v524 = vmul.f32 %v518, %v522
        %v525 = vld [vmem:[%s405] sm:$0xf]
        %v526 = vunpack.c.l.bf16 %v525
        %v527 = vmul.f32 %v524, %v526
        %v528 = vpack.c.bf16 %v527, %v527
        %vm529 = vcmask 60416
        %530 = vst.msk [vmem:[%s422] sm:$0xf] %vm529, %v528
      $region48: #{tp_decoder_layer_forward.5} parent=39 // pred_fallthru
        _
      %s531 = sadd.s32 %s22, %s24
      %p532 = scmp.lt.s32.totalorder %s23, 3
      %s533 = scalar_select %p532, %s23, 3
      %p534 = scmp.lt.s32.totalorder %s531, 1
      %s535 = scalar_select %p534, %s531, 1
      %s536 = smul.addr %s533, 2
      %s537 = sadd.s32 %s535, %s536
      %s538 = smul.addr %s537, 4
      %s539 = scalar_lea.vmem %s5, %s538
      // Predicated region
      $region49: #{tp_decoder_layer_forward.5} parent=39 // pred_check
        %p540 = pneg %p212
      $region50: #{tp_decoder_layer_forward.5} parent=39 // pred_check_branch
        %542 = sbr.rel (%p540) target = $region52
      $region51: #{tp_decoder_layer_forward.5} parent=39 // pred_region
        %s543 = sadd.s32 %s22, %s24
      $region52: #{tp_decoder_layer_forward.5} parent=39 // pred_fallthru
        _
    $region40: #{tp_decoder_layer_forward.5} parent=5 // pred_fallthru
      _
    %p544 = scmp.le.s32.totalorder 2, %s11
    // Predicated region
    $region53: #{tp_decoder_layer_forward.5} parent=5 // pred_check
      %p545 = pneg %p544
    $region54: #{tp_decoder_layer_forward.5} parent=5 // pred_check_branch
      %547 = sbr.rel (%p545) target = $region56
    $region55: #{tp_decoder_layer_forward.5} parent=5 // pred_region
      %s548 = ssub.s32 %s11, 2
      // Predicated region
      $region57: #{tp_decoder_layer_forward.5} parent=55 // pred_check
        %p549 = pneg %p218
      $region58: #{tp_decoder_layer_forward.5} parent=55 // pred_check_branch
        %551 = sbr.rel (%p549) target = $region60
      $region59: #{tp_decoder_layer_forward.5} parent=55 // pred_region
        %s552 = sadd.s32 %s26, %s28
        %p553 = scmp.lt.s32.totalorder %s27, 3
        %s554 = scalar_select %p553, %s27, 3
        %p555 = scmp.lt.s32.totalorder %s552, 1
        %s556 = scalar_select %p555, %s552, 1
        %s557 = smul.addr %s554, 2
        %s558 = sadd.s32 %s556, %s557
        %s559 = smul.addr %s558, 4
        %s560 = scalar_lea.vmem %s5, %s559
      $region60: #{tp_decoder_layer_forward.5} parent=55 // pred_fallthru
        _
    $region56: #{tp_decoder_layer_forward.5} parent=5 // pred_fallthru
      _
  $region6: #{tp_decoder_layer_forward.5} parent=0 // loop_footer
    %s15 = sadd.s32 1, %s11
  $region7: #{tp_decoder_layer_forward.5} parent=0 // loop_footer_branch
    %10 = sbr.rel target = $region3
  $region8: #{tp_decoder_layer_forward.5} parent=0 // loop_exit
    _

// kernel: tp_decoder_layer_forward.7
$region0: #{tp_decoder_layer_forward.7}
  #allocation0 [shape = 'u32[]', space=smem, size = 0x4, offset = 0x4, fixed_abs, tag = 'smem constant byte address 0x4 - core index']
  #allocation1 [shape = 'u32[72,128]{1,0:T(1,128)}', space=vmem, size = 0x9000, scoped, tag = 'internal scratch']
  #allocation2 [shape = 'f32[16,32]{1,0:T(8,128)}', space=vmem, size = 0x2000, scoped, tag = 'scratch operand']
  %s0 = inlined_call_operand.vmem [shape: f32[16,32], index: 0, kind: input, shape index: {}]
  %s1 = inlined_call_operand.vmem [shape: bf16[32,128], index: 1, kind: input, shape index: {}]
  %s2 = inlined_call_operand.vmem [shape: f32[1,128], index: 2, kind: input, shape index: {}]
  %s3 = inlined_call_operand.vmem [shape: bf16[128,32], index: 3, kind: input, shape index: {}]
  %s4 = inlined_call_operand.vmem [shape: f32[1,32], index: 4, kind: input, shape index: {}]
  %s5 = inlined_call_operand.vmem [shape: f32[1,32], index: 5, kind: input, shape index: {}]
  %s6 = inlined_call_operand.vmem [shape: f32[1,32], index: 6, kind: input, shape index: {}]
  %s7 = inlined_call_operand.hbm [shape: f32[16,32], index: 7, kind: output, shape index: {}]
  %s8 = sld [smem:[#allocation0]]
  $region46: #{tp_decoder_layer_forward.7} parent=0
    _
  %s10 = ssub.s32 1, %s8
  %s11 = scalar_select 0, %s10, %s8
  $region1: #{tp_decoder_layer_forward.7} parent=0
    #allocation3 [shape = 'u8[8192]{0}', space=vmem, size = 0x2000, scoped, tag = 'output window, operand 0, single buffered']
    #allocation4 [shape = 's32[1]{0}', space=sflag, size = 0x4, scoped, tag = 'scoped memory for tp_decoder_layer_forward.7']
    %12 = vsyncpa [#allocation4], 0
    // Predicated region
    $region2: #{tp_decoder_layer_forward.7} parent=1 // pred_check
      _
    $region3: #{tp_decoder_layer_forward.7} parent=1 // pred_check_branch
      %14 = sbr.rel (0) target = $region5
    $region4: #{tp_decoder_layer_forward.7} parent=1 // pred_region
      _
    $region5: #{tp_decoder_layer_forward.7} parent=1 // pred_fallthru
      _
    // Predicated region
    $region6: #{tp_decoder_layer_forward.7} parent=1 // pred_check
      _
    $region7: #{tp_decoder_layer_forward.7} parent=1 // pred_check_branch
      %16 = sbr.rel (0) target = $region9
    $region8: #{tp_decoder_layer_forward.7} parent=1 // pred_region
      _
    $region9: #{tp_decoder_layer_forward.7} parent=1 // pred_fallthru
      _
    // Predicated region
    $region10: #{tp_decoder_layer_forward.7} parent=1 // pred_check
      _
    $region11: #{tp_decoder_layer_forward.7} parent=1 // pred_check_branch
      %18 = sbr.rel (0) target = $region13
    $region12: #{tp_decoder_layer_forward.7} parent=1 // pred_region
      _
    $region13: #{tp_decoder_layer_forward.7} parent=1 // pred_fallthru
      _
    // Predicated region
    $region14: #{tp_decoder_layer_forward.7} parent=1 // pred_check
      _
    $region15: #{tp_decoder_layer_forward.7} parent=1 // pred_check_branch
      %20 = sbr.rel (0) target = $region17
    $region16: #{tp_decoder_layer_forward.7} parent=1 // pred_region
      _
    $region17: #{tp_decoder_layer_forward.7} parent=1 // pred_fallthru
      _
    // Predicated region
    $region18: #{tp_decoder_layer_forward.7} parent=1 // pred_check
      _
    $region19: #{tp_decoder_layer_forward.7} parent=1 // pred_check_branch
      %22 = sbr.rel (0) target = $region21
    $region20: #{tp_decoder_layer_forward.7} parent=1 // pred_region
      _
    $region21: #{tp_decoder_layer_forward.7} parent=1 // pred_fallthru
      _
    // Predicated region
    $region22: #{tp_decoder_layer_forward.7} parent=1 // pred_check
      _
    $region23: #{tp_decoder_layer_forward.7} parent=1 // pred_check_branch
      %24 = sbr.rel (0) target = $region25
    $region24: #{tp_decoder_layer_forward.7} parent=1 // pred_region
      _
    $region25: #{tp_decoder_layer_forward.7} parent=1 // pred_fallthru
      _
    // Predicated region
    $region26: #{tp_decoder_layer_forward.7} parent=1 // pred_check
      _
    $region27: #{tp_decoder_layer_forward.7} parent=1 // pred_check_branch
      %26 = sbr.rel (0) target = $region29
    $region28: #{tp_decoder_layer_forward.7} parent=1 // pred_region
      _
    $region29: #{tp_decoder_layer_forward.7} parent=1 // pred_fallthru
      _
    %p28 = scmp.eq.s32.totalorder 0, 0
    // Predicated region
    $region30: #{tp_decoder_layer_forward.7} parent=1 // pred_check
      %p29 = pneg %p28
    $region31: #{tp_decoder_layer_forward.7} parent=1 // pred_check_branch
      %31 = sbr.rel (%p29) target = $region33
    $region32: #{tp_decoder_layer_forward.7} parent=1 // pred_region
      %vm32 = vcmask 261120
      %33 = vst.msk [vmem:[#allocation2] sm:$0xff] %vm32, 0.0
      %34 = vst.msk [vmem:[#allocation2 + $0x8] sm:$0xff] %vm32, 0.0
    $region33: #{tp_decoder_layer_forward.7} parent=1 // pred_fallthru
      _
    %v35 = vld [vmem:[%s0] sm:$0xff]
    %v36 = vld [vmem:[%s0 + $0x8] sm:$0xff]
    %v37 = vpack.c.bf16 %v36, %v35
    %v38 = vld [vmem:[%s1] sm:$0xf]
    %v39 = vld [vmem:[%s1 + $0x4] sm:$0xf]
    %v40 = vld [vmem:[%s1 + $0x8] sm:$0xf]
    %v41 = vld [vmem:[%s1 + $0xc] sm:$0xf]
    %v42 = vld [vmem:[%s2] sm:$0x1]
    %v44 = vperm.slane %v42, 0
    %v50 = vunpack.c.l.b16 %v38
    %v51 = vunpack.c.l.b16 %v39
    %v52 = vunpack.c.l.b16 %v40
    %v53 = vunpack.c.l.b16 %v41
    %v54 = vpack.c.b16 %v51, %v50
    %v55 = vpack.c.b16 %v53, %v52
    %vm58 = vcmask 261120
    %v60 = vsel %vm58, %v37, 0
    %62 = vmatpush.bf16.msra.mxu0 0
    %63 = vmatpush.bf16.msra.mxu0 0
    %64 = vmatpush.bf16.msra.mxu0 0
    %65 = vmatpush.bf16.msra.mxu0 0
    %66 = vmatpush.bf16.msra.mxu0 0
    %67 = vmatpush.bf16.msra.mxu0 0
    %68 = vmatpush.bf16.msra.mxu0 %v55
    %69 = vmatpush.bf16.msra.mxu0 %v54
    %70 = vmatmul.bf16.gmra.mxu0 %v60
    %v71 = vpop.f32.mrf.mxu0
    %v72 = vadd.f32 %v44, %v71
    %v73 = vpop.f32.mrf.mxu0
    %v74 = vadd.f32 %v44, %v73
    %75 = vdwg.mxu0
    %v76 = vmax.f32 %v72, 0.0
    %v77 = vmax.f32 %v74, 0.0
    %v78 = vpack.c.bf16 %v77, %v76
    %v79 = vld [vmem:[#allocation2] sm:$0xff]
    %v80 = vld [vmem:[#allocation2 + $0x8] sm:$0xff]
    %v81 = vld [vmem:[%s3] sm:$0xf]
    %v82 = vld [vmem:[%s3 + $0x4] sm:$0xf]
    %v83 = vld [vmem:[%s3 + $0x8] sm:$0xf]
    %v84 = vld [vmem:[%s3 + $0xc] sm:$0xf]
    %v85 = vld [vmem:[%s3 + $0x10] sm:$0xf]
    %v86 = vld [vmem:[%s3 + $0x14] sm:$0xf]
    %v87 = vld [vmem:[%s3 + $0x18] sm:$0xf]
    %v88 = vld [vmem:[%s3 + $0x1c] sm:$0xf]
    %v89 = vld [vmem:[%s3 + $0x20] sm:$0xf]
    %v90 = vld [vmem:[%s3 + $0x24] sm:$0xf]
    %v91 = vld [vmem:[%s3 + $0x28] sm:$0xf]
    %v92 = vld [vmem:[%s3 + $0x2c] sm:$0xf]
    %v93 = vld [vmem:[%s3 + $0x30] sm:$0xf]
    %v94 = vld [vmem:[%s3 + $0x34] sm:$0xf]
    %v95 = vld [vmem:[%s3 + $0x38] sm:$0xf]
    %v96 = vld [vmem:[%s3 + $0x3c] sm:$0xf]
    %v113 = vunpack.c.l.b16 %v81
    %v114 = vunpack.c.l.b16 %v82
    %v115 = vunpack.c.l.b16 %v83
    %v116 = vunpack.c.l.b16 %v84
    %v117 = vunpack.c.l.b16 %v85
    %v118 = vunpack.c.l.b16 %v86
    %v119 = vunpack.c.l.b16 %v87
    %v120 = vunpack.c.l.b16 %v88
    %v121 = vunpack.c.l.b16 %v89
    %v122 = vunpack.c.l.b16 %v90
    %v123 = vunpack.c.l.b16 %v91
    %v124 = vunpack.c.l.b16 %v92
    %v125 = vunpack.c.l.b16 %v93
    %v126 = vunpack.c.l.b16 %v94
    %v127 = vunpack.c.l.b16 %v95
    %v128 = vunpack.c.l.b16 %v96
    %v129 = vpack.c.b16 %v114, %v113
    %v130 = vpack.c.b16 %v116, %v115
    %v131 = vpack.c.b16 %v118, %v117
    %v132 = vpack.c.b16 %v120, %v119
    %v133 = vpack.c.b16 %v122, %v121
    %v134 = vpack.c.b16 %v124, %v123
    %v135 = vpack.c.b16 %v126, %v125
    %v136 = vpack.c.b16 %v128, %v127
    %145 = vmatpush.bf16.msra.mxu0 %v136
    %146 = vmatpush.bf16.msra.mxu0 %v135
    %147 = vmatpush.bf16.msra.mxu0 %v134
    %148 = vmatpush.bf16.msra.mxu0 %v133
    %149 = vmatpush.bf16.msra.mxu0 %v132
    %150 = vmatpush.bf16.msra.mxu0 %v131
    %151 = vmatpush.bf16.msra.mxu0 %v130
    %152 = vmatpush.bf16.msra.mxu0 %v129
    %153 = vmatmul.bf16.gmra.mxu0 %v78
    %v154 = vpop.f32.mrf.mxu0
    %v155 = vadd.f32 0.0, %v154
    %v156 = vpop.f32.mrf.mxu0
    %v157 = vadd.f32 0.0, %v156
    %158 = vdwg.mxu0
    %v159 = vadd.f32 %v79, %v155
    %v160 = vadd.f32 %v80, %v157
    %161 = vst.msk [vmem:[#allocation2] sm:$0xff] %vm58, %v159
    %162 = vst.msk [vmem:[#allocation2 + $0x8] sm:$0xff] %vm58, %v160
    // Predicated region
    $region34: #{tp_decoder_layer_forward.7} parent=1 // pred_check
      %p163 = pneg %p28
    $region35: #{tp_decoder_layer_forward.7} parent=1 // pred_check_branch
      %165 = sbr.rel (%p163) target = $region37
    $region36: #{tp_decoder_layer_forward.7} parent=1 // pred_region
      %v166 = vld [vmem:[#allocation2] sm:$0xff]
      %v167 = vld [vmem:[#allocation2 + $0x8] sm:$0xff]
      %v168 = vld [vmem:[%s4] sm:$0x1]
      %v170 = vperm.slane %v168, 0
      %v172 = vadd.f32 %v166, %v170
      %v173 = vadd.f32 %v167, %v170
      %v174 = vld [vmem:[%s0] sm:$0xff]
      %v175 = vld [vmem:[%s0 + $0x8] sm:$0xff]
      %v176 = vadd.f32 %v172, %v174
      %v177 = vadd.f32 %v173, %v175
      %v178 = vsel %vm58, %v176, 0.0
      %179 = vadd.xlane.f32.xlu0 %v178
      %v180 = vpop.xlane.xlu0 %179
      %v181 = vsel %vm58, %v177, 0.0
      %182 = vadd.xlane.f32.xlu0 %v181
      %v183 = vpop.xlane.xlu0 %182
      %v184 = vmul.f32 %v180, 0.03125
      %v185 = vmul.f32 %v183, 0.03125
      %v186 = vmul.f32 %v176, %v176
      %v187 = vmul.f32 %v177, %v177
      %v188 = vsel %vm58, %v186, 0.0
      %189 = vadd.xlane.f32.xlu0 %v188
      %v190 = vpop.xlane.xlu0 %189
      %v191 = vsel %vm58, %v187, 0.0
      %192 = vadd.xlane.f32.xlu0 %v191
      %v193 = vpop.xlane.xlu0 %192
      %v194 = vmul.f32 %v190, 0.03125
      %v195 = vmul.f32 %v193, 0.03125
      %v196 = vmul.f32 %v184, %v184
      %v197 = vmul.f32 %v185, %v185
      %v198 = vsub.f32 %v194, %v196
      %v199 = vsub.f32 %v195, %v197
      %v200 = vmax.f32 %v198, 0.0
      %v201 = vmax.f32 %v199, 0.0
      %v202 = vsub.f32 %v176, %v184
      %v203 = vsub.f32 %v177, %v185
      %v204 = vadd.f32 %v200, 1e-05
      %v205 = vadd.f32 %v201, 1e-05
      %v206 = vrsqrt.pop %v204
      %v207 = vmul.f32 %v206, %v204
      %v208 = vmul.f32 %v207, %v206
      %v209 = vmul.f32 0.5, %v208
      %v210 = vsub.f32 1.5, %v209
      %v211 = vmul.f32 %v206, %v210
      %vm212 = vweird.f32 %v204
      %vm213 = vweird.f32 %v206
      %vm214 = vmor %vm212, %vm213
      %v215 = vsel %vm214, %v206, %v211
      %v216 = vrsqrt.pop %v205
      %v217 = vmul.f32 %v216, %v205
      %v218 = vmul.f32 %v217, %v216
      %v219 = vmul.f32 0.5, %v218
      %v220 = vsub.f32 1.5, %v219
      %v221 = vmul.f32 %v216, %v220
      %vm222 = vweird.f32 %v205
      %vm223 = vweird.f32 %v216
      %vm224 = vmor %vm222, %vm223
      %v225 = vsel %vm224, %v216, %v221
      %v226 = vmul.f32 %v202, %v215
      %v227 = vmul.f32 %v203, %v225
      %v228 = vld [vmem:[%s5] sm:$0x1]
      %v230 = vperm.slane %v228, 0
      %v232 = vmul.f32 %v226, %v230
      %v233 = vmul.f32 %v227, %v230
      %v234 = vld [vmem:[%s6] sm:$0x1]
      %v236 = vperm.slane %v234, 0
      %v238 = vadd.f32 %v232, %v236
      %v239 = vadd.f32 %v233, %v236
      %240 = vst.msk [vmem:[#allocation3] sm:$0xff] %vm58, %v238
      %241 = vst.msk [vmem:[#allocation3 + $0x8] sm:$0xff] %vm58, %v239
    $region37: #{tp_decoder_layer_forward.7} parent=1 // pred_fallthru
      _
    // Predicated region
    $region38: #{tp_decoder_layer_forward.7} parent=1 // pred_check
      _
    $region39: #{tp_decoder_layer_forward.7} parent=1 // pred_check_branch
      %243 = sbr.rel (0) target = $region41
    $region40: #{tp_decoder_layer_forward.7} parent=1 // pred_region
      %245 = vsyncadd [#allocation4], 0
      %s246 = sshll.u32 [#allocation3], 4
      %s247 = int_to_ptr.vmem [resolvable:$true] %s246
      %s248 = sshll.u32 %s7, 4
      %s249 = int_to_ptr.hbm [resolvable:$true] %s248
      %254 = dma.vmem_to_hbm [thread:$0]  %s247, 256, %s249, [#allocation4], 128, 128, 8
    $region41: #{tp_decoder_layer_forward.7} parent=1 // pred_fallthru
      _
    // Predicated region
    $region42: #{tp_decoder_layer_forward.7} parent=1 // pred_check
      _
    $region43: #{tp_decoder_layer_forward.7} parent=1 // pred_check_branch
      %256 = sbr.rel (0) target = $region45
    $region44: #{tp_decoder_layer_forward.7} parent=1 // pred_region
      %258 = dma.done [#allocation4], 256
    $region45: #{tp_decoder_layer_forward.7} parent=1 // pred_fallthru
      _
    %259 = vsyncpa [#allocation4], 1

</llo_original>
